<compile_context>
chip_gen: v6e
topology: v6e:2x2x1
jax: 0.10.0
libtpu: 0.0.40
codegen_flags: <defaults>
</compile_context>

<pallas_src>
import jax
import jax.numpy as jnp
from jax.experimental import pallas as pl
from jax.experimental.pallas import tpu as pltpu

_SUBLANE = 8
_LANE = 128
_NEG_INF = -1e30  # fill value for padded label bias columns (never wins argmax)


def _round_up(x, m):
    return (x + m - 1) // m * m


def _vmem_footprint(tile_n, d, h, l, x_buffers=2):
    """Approximate VMEM bytes for one pallas_call configuration."""
    weights = 2 * (d * h + h * h + h * l)          # bf16, single-buffered
    biases = 4 * (2 * h + l)                       # f32
    x_bytes = x_buffers * tile_n * d * 4           # f32 input tiles (pipelined)
    out_bytes = 2 * tile_n * 4                     # int32 tag row (double buf)
    scratch = 3 * tile_n * max(h, l) * 4           # f32 h / logits / temps
    return weights + biases + x_bytes + out_bytes + scratch


def _pick_tile_n(n, d, h, l, *, max_tile=1024, vmem_budget=48 * 1024 * 1024):
    """Largest row tile <= max_tile that fits a chip-agnostic VMEM budget.
    (v5e/v6e could go to 2048 with their 128 MiB VMEM; 48 MiB keeps headroom
    on v7x's 64 MiB per TensorCore.)"""
    tile = min(max_tile, _round_up(n, _SUBLANE))
    while tile > _SUBLANE and _vmem_footprint(tile, d, h, l) > vmem_budget:
        tile = max(_SUBLANE, (tile // 2) // _SUBLANE * _SUBLANE)
    return tile


def seq_labeler_kernel(x_ref, w1_ref, b1_ref, w2_ref, b2_ref,
                       wo_ref, bo_ref, slopes_ref, tag_ref):
    # x_ref: (TILE_N, D) f32 row tile of flattened (batch*seq, bilstm_dims).
    # Cast to bf16 here (VPU, hidden under DMA/MXU) instead of a wrapper pass.
    x = x_ref[...].astype(jnp.bfloat16)
    a1 = slopes_ref[0]          # SMEM scalars (PReLU slopes)
    a2 = slopes_ref[1]

    # Layer 0: Linear(D, H) + PReLU   (bf16 MXU operands, f32 accumulation)
    h = jnp.dot(x, w1_ref[...], preferred_element_type=jnp.float32) + b1_ref[...]
    h = jnp.where(h > 0, h, a1 * h)

    # Layer 1: Linear(H, H) + PReLU
    h = jnp.dot(h.astype(jnp.bfloat16), w2_ref[...],
                preferred_element_type=jnp.float32) + b2_ref[...]
    h = jnp.where(h > 0, h, a2 * h)

    # Output projection: Linear(H, L_pad).  Padded label columns carry a
    # -1e30 bias so they can never win the argmax.
    logits = jnp.dot(h.astype(jnp.bfloat16), wo_ref[...],
                     preferred_element_type=jnp.float32) + bo_ref[...]  # (T, Lp)

    # argmax over labels (lane axis), first-index tie-break (== torch.max).
    # Reduce first, then relayout only the (T, 1) int32 column to the
    # lane-dense (1, T) output row: ~T*4 B of cross-layout traffic instead of
    # transposing the whole f32 logits tile (T*Lp*4 B) through the XLU.
    num_labels = logits.shape[1]
    lane_id = jax.lax.broadcasted_iota(jnp.int32, logits.shape, 1)
    mx = jnp.max(logits, axis=1, keepdims=True)                      # (T, 1)
    tag_col = jnp.min(jnp.where(logits == mx, lane_id, num_labels),
                      axis=1, keepdims=True)                         # (T, 1) i32
    tag_ref[...] = tag_col.T                                         # (1, T)


def sequence_labeler_forward(lstm_features, mask, kparams, *, tile_n=None):
    """lstm_features: (B, S, D) float32, mask: (B, S) -> (B, S) int32 tags."""
    B, S, D = lstm_features.shape
    N = B * S
    w1, b1, w2, b2, wo, bo, slopes = kparams
    H = w1.shape[1]   # padded hidden size
    L = wo.shape[1]   # padded label size

    if tile_n is None:
        tile_n = _pick_tile_n(N, D, H, L)
    num_tiles = pl.cdiv(N, tile_n)
    n_pad = num_tiles * tile_n

    x = lstm_features.reshape(N, D)          # no dtype cast in the wrapper
    if n_pad != N:
        # TODO(synk): handle the remainder tile in-kernel instead of padding.
        x = jnp.pad(x, ((0, n_pad - N), (0, 0)))

    vmem_limit = int(min(64 * 1024 * 1024,
                         max(32 * 1024 * 1024,
                             1.5 * _vmem_footprint(tile_n, D, H, L))))

    cost = pl.CostEstimate(
        flops=2 * n_pad * (D * H + H * H + H * L),
        transcendentals=0,
        bytes_accessed=int(n_pad * D * 4                      # x (f32)
                           + (D * H + H * H + H * L) * 2      # weights (bf16)
                           + (2 * H + L) * 4 + 2 * 4          # biases + slopes
                           + n_pad * 4),                      # tag output
    )

    def _resident(shape, mode):
        # Constant-index (resident) operand; single-buffer when supported.
        if mode is None:
            return pl.BlockSpec(shape, lambda i: (0, 0))
        return pl.BlockSpec(shape, lambda i: (0, 0), pipeline_mode=mode)

    def run(weight_mode):
        call = pl.pallas_call(
            seq_labeler_kernel,
            out_shape=jax.ShapeDtypeStruct((num_tiles, tile_n), jnp.int32),
            grid=(num_tiles,),
            in_specs=[
                pl.BlockSpec((tile_n, D), lambda i: (i, 0)),   # x: streamed tiles
                _resident((D, H), weight_mode),                # w1 (resident)
                _resident((1, H), weight_mode),                # b1
                _resident((H, H), weight_mode),                # w2
                _resident((1, H), weight_mode),                # b2
                _resident((H, L), weight_mode),                # wo
                _resident((1, L), weight_mode),                # bo
                pl.BlockSpec(memory_space=pltpu.MemorySpace.SMEM),  # PReLU slopes
            ],
            out_specs=pl.BlockSpec((1, tile_n), lambda i: (i, 0)),  # lane-dense
            compiler_params=pltpu.CompilerParams(
                dimension_semantics=("parallel",),
                vmem_limit_bytes=vmem_limit),
            cost_estimate=cost,
        )
        return call(x, w1, b1, w2, b2, wo, bo, slopes)

    try:
        # Single-buffer the constant-index weights/biases (halves their VMEM).
        tag_tiles = run(pl.Buffered(1))
    except Exception:
        # Compatibility fallback for JAX versions without single-buffer
        # pipeline_mode support on TPU: default double-buffering.
        tag_tiles = run(None)

    tag = tag_tiles.reshape(n_pad)[:N].reshape(B, S)
    # tag_seq = mask.long() * tag_seq  (folded into the wrapper; fuses in XLA)
    return mask.astype(jnp.int32) * tag


def init_params(key, bilstm_dims, hidden_size, label_size):
    """Deterministic init mirroring the module shapes (layer_size=2)."""
    L = label_size + 2  # self.label_size = label_size + 2
    ks = jax.random.split(key, 6)
    scale = 0.1
    w1 = scale * jax.random.normal(ks[0], (bilstm_dims, hidden_size), jnp.float32)
    b1 = scale * jax.random.normal(ks[1], (1, hidden_size), jnp.float32)
    a1 = jnp.full((1, 1), 0.25, jnp.float32)       # nn.PReLU default slope
    w2 = scale * jax.random.normal(ks[2], (hidden_size, hidden_size), jnp.float32)
    b2 = scale * jax.random.normal(ks[3], (1, hidden_size), jnp.float32)
    a2 = jnp.full((1, 1), 0.25, jnp.float32)
    wo = scale * jax.random.normal(ks[4], (hidden_size, L), jnp.float32)
    bo = scale * jax.random.normal(ks[5], (1, L), jnp.float32)
    return (w1, b1, a1, w2, b2, a2, wo, bo)


def prepare_params(params, *, mxu_align=256, lane_align=128):
    """Kernel-ready params, padded once at prep time:
      * H -> multiple of 256 (MXU width on v6e/v7x; 128 suffices on v5e) with
        zero-filled extra rows/cols -- padded hidden units stay exactly zero
        through PReLU, so results are bit-identical.
      * L = label_size+2 -> multiple of 128 (lane-dense logits); padded bias
        columns are -1e30 so argmax never selects them.
    Weights bf16, biases f32, PReLU slopes packed as a (2,) f32 SMEM scalar."""
    w1, b1, a1, w2, b2, a2, wo, bo = params
    D, H = w1.shape
    L = wo.shape[1]
    Hp = _round_up(H, mxu_align)
    Lp = _round_up(L, lane_align)

    w1p = jnp.zeros((D, Hp), jnp.bfloat16).at[:, :H].set(w1.astype(jnp.bfloat16))
    b1p = jnp.zeros((1, Hp), jnp.float32).at[:, :H].set(b1)
    w2p = jnp.zeros((Hp, Hp), jnp.bfloat16).at[:H, :H].set(w2.astype(jnp.bfloat16))
    b2p = jnp.zeros((1, Hp), jnp.float32).at[:, :H].set(b2)
    wop = jnp.zeros((Hp, Lp), jnp.bfloat16).at[:H, :L].set(wo.astype(jnp.bfloat16))
    bop = jnp.full((1, Lp), _NEG_INF, jnp.float32).at[:, :L].set(bo)
    slopes = jnp.concatenate([a1.reshape(1), a2.reshape(1)]).astype(jnp.float32)
    return (w1p, b1p, w2p, b2p, wop, bop, slopes)


def reference_forward(lstm_features, mask, params):
    """Pure-JAX reference of the PyTorch forward (non-CRF path) on the
    ORIGINAL (unpadded) params, with the same precision choices as the kernel
    (bf16 matmul operands, f32 accumulation)."""
    w1, b1, a1, w2, b2, a2, wo, bo = params
    B, S, D = lstm_features.shape
    x = lstm_features.reshape(B * S, D).astype(jnp.bfloat16)
    h = jnp.dot(x, w1.astype(jnp.bfloat16), preferred_element_type=jnp.float32) + b1
    h = jnp.where(h > 0, h, a1 * h)
    h = jnp.dot(h.astype(jnp.bfloat16), w2.astype(jnp.bfloat16),
                preferred_element_type=jnp.float32) + b2
    h = jnp.where(h > 0, h, a2 * h)
    logits = jnp.dot(h.astype(jnp.bfloat16), wo.astype(jnp.bfloat16),
                     preferred_element_type=jnp.float32) + bo
    tag = jnp.argmax(logits, axis=-1).astype(jnp.int32).reshape(B, S)
    return mask.astype(jnp.int32) * tag


if __name__ == "__main__":
    # Small shapes: batch=2, seq=8, bilstm_dims=32, hidden=32, label_size=6 -> L=8
    B, S, D, H, LAB = 2, 8, 32, 32, 6

    key = jax.random.PRNGKey(0)
    k_x, k_m, k_p = jax.random.split(key, 3)
    lstm_features = jax.random.normal(k_x, (B, S, D), jnp.float32)
    mask = (jax.random.uniform(k_m, (B, S)) > 0.2).astype(jnp.int32)
    params = init_params(k_p, D, H, LAB)
    kparams = prepare_params(params)

    tag_seq = sequence_labeler_forward(lstm_features, mask, kparams)
    tag_seq = jax.block_until_ready(tag_seq)

    ref = reference_forward(lstm_features, mask, params)
    assert tag_seq.shape == (B, S) and tag_seq.dtype == jnp.int32
    assert bool(jnp.all(tag_seq == ref)), "Pallas kernel mismatch vs reference"

    print("KERNEL_OK")
</pallas_src>

<mosaic_0001>
module attributes {stable_mosaic.version = 11 : i64} {
  func.func @seq_labeler_kernel(%arg0: i32, %arg1: memref<16x32xf32, #tpu.memory_space<vmem>>, %arg2: memref<32x256xbf16, #tpu.memory_space<vmem>>, %arg3: memref<1x256xf32, #tpu.memory_space<vmem>>, %arg4: memref<256x256xbf16, #tpu.memory_space<vmem>>, %arg5: memref<1x256xf32, #tpu.memory_space<vmem>>, %arg6: memref<256x128xbf16, #tpu.memory_space<vmem>>, %arg7: memref<1x128xf32, #tpu.memory_space<vmem>>, %arg8: memref<2xf32, #tpu.memory_space<smem>>, %arg9: memref<1x16xi32, #tpu.memory_space<vmem>>) attributes {dimension_semantics = [#tpu.dimension_semantics<parallel>], iteration_bounds = array<i64: 1>, scalar_prefetch = 0 : i64, scratch_operands = 0 : i64, tpu.core_type = #tpu.core_type<tc>, window_params = [{transform_indices = @transform_0, window_bounds = array<i64: 16, 32>}, {pipeline_mode = #tpu.pipeline_mode<synchronous>, transform_indices = @transform_1, window_bounds = array<i64: 32, 256>}, {pipeline_mode = #tpu.pipeline_mode<synchronous>, transform_indices = @transform_2, window_bounds = array<i64: 1, 256>}, {pipeline_mode = #tpu.pipeline_mode<synchronous>, transform_indices = @transform_3, window_bounds = array<i64: 256, 256>}, {pipeline_mode = #tpu.pipeline_mode<synchronous>, transform_indices = @transform_4, window_bounds = array<i64: 1, 256>}, {pipeline_mode = #tpu.pipeline_mode<synchronous>, transform_indices = @transform_5, window_bounds = array<i64: 256, 128>}, {pipeline_mode = #tpu.pipeline_mode<synchronous>, transform_indices = @transform_6, window_bounds = array<i64: 1, 128>}, {transform_indices = @transform_7, window_bounds = array<i64: 2>}, {transform_indices = @transform_8, window_bounds = array<i64: 1, 16>}]} {
    %c0 = arith.constant 0 : index
    %c0_0 = arith.constant 0 : index
    %0 = vector.load %arg1[%c0, %c0_0] : memref<16x32xf32, #tpu.memory_space<vmem>>, vector<16x32xf32>
    %1 = arith.truncf %0 : vector<16x32xf32> to vector<16x32xbf16>
    %c0_1 = arith.constant 0 : index
    %2 = memref.load %arg8[%c0_1] : memref<2xf32, #tpu.memory_space<smem>>
    %c1 = arith.constant 1 : index
    %3 = memref.load %arg8[%c1] : memref<2xf32, #tpu.memory_space<smem>>
    %c0_2 = arith.constant 0 : index
    %c0_3 = arith.constant 0 : index
    %4 = vector.load %arg2[%c0_2, %c0_3] : memref<32x256xbf16, #tpu.memory_space<vmem>>, vector<32x256xbf16>
    %cst = arith.constant dense<0.000000e+00> : vector<16x256xf32>
    %5 = tpu.matmul %1, %4, %cst {dimension_numbers = #tpu.dot_dimension_numbers<[1], [0], [0], [1], [0, 0, 1, 1], [], []>} : vector<16x32xbf16>, vector<32x256xbf16>, vector<16x256xf32> -> vector<16x256xf32>
    %c0_4 = arith.constant 0 : index
    %c0_5 = arith.constant 0 : index
    %6 = vector.load %arg3[%c0_4, %c0_5] : memref<1x256xf32, #tpu.memory_space<vmem>>, vector<1x256xf32>
    %7 = vector.broadcast %6 : vector<1x256xf32> to vector<16x256xf32>
    %8 = arith.addf %5, %7 : vector<16x256xf32>
    %cst_6 = arith.constant 0.000000e+00 : f32
    %9 = vector.broadcast %cst_6 : f32 to vector<16x256xf32>
    %10 = arith.cmpf ogt, %8, %9 : vector<16x256xf32>
    %11 = vector.broadcast %2 : f32 to vector<16x256xf32>
    %12 = arith.mulf %11, %8 : vector<16x256xf32>
    %13 = arith.select %10, %8, %12 : vector<16x256xi1>, vector<16x256xf32>
    %14 = arith.truncf %13 : vector<16x256xf32> to vector<16x256xbf16>
    %c0_7 = arith.constant 0 : index
    %c0_8 = arith.constant 0 : index
    %15 = vector.load %arg4[%c0_7, %c0_8] : memref<256x256xbf16, #tpu.memory_space<vmem>>, vector<256x256xbf16>
    %cst_9 = arith.constant dense<0.000000e+00> : vector<16x256xf32>
    %16 = tpu.matmul %14, %15, %cst_9 {dimension_numbers = #tpu.dot_dimension_numbers<[1], [0], [0], [1], [0, 0, 1, 1], [], []>} : vector<16x256xbf16>, vector<256x256xbf16>, vector<16x256xf32> -> vector<16x256xf32>
    %c0_10 = arith.constant 0 : index
    %c0_11 = arith.constant 0 : index
    %17 = vector.load %arg5[%c0_10, %c0_11] : memref<1x256xf32, #tpu.memory_space<vmem>>, vector<1x256xf32>
    %18 = vector.broadcast %17 : vector<1x256xf32> to vector<16x256xf32>
    %19 = arith.addf %16, %18 : vector<16x256xf32>
    %cst_12 = arith.constant 0.000000e+00 : f32
    %20 = vector.broadcast %cst_12 : f32 to vector<16x256xf32>
    %21 = arith.cmpf ogt, %19, %20 : vector<16x256xf32>
    %22 = vector.broadcast %3 : f32 to vector<16x256xf32>
    %23 = arith.mulf %22, %19 : vector<16x256xf32>
    %24 = arith.select %21, %19, %23 : vector<16x256xi1>, vector<16x256xf32>
    %25 = arith.truncf %24 : vector<16x256xf32> to vector<16x256xbf16>
    %c0_13 = arith.constant 0 : index
    %c0_14 = arith.constant 0 : index
    %26 = vector.load %arg6[%c0_13, %c0_14] : memref<256x128xbf16, #tpu.memory_space<vmem>>, vector<256x128xbf16>
    %cst_15 = arith.constant dense<0.000000e+00> : vector<16x128xf32>
    %27 = tpu.matmul %25, %26, %cst_15 {dimension_numbers = #tpu.dot_dimension_numbers<[1], [0], [0], [1], [0, 0, 1, 1], [], []>} : vector<16x256xbf16>, vector<256x128xbf16>, vector<16x128xf32> -> vector<16x128xf32>
    %c0_16 = arith.constant 0 : index
    %c0_17 = arith.constant 0 : index
    %28 = vector.load %arg7[%c0_16, %c0_17] : memref<1x128xf32, #tpu.memory_space<vmem>>, vector<1x128xf32>
    %29 = vector.broadcast %28 : vector<1x128xf32> to vector<16x128xf32>
    %30 = arith.addf %27, %29 : vector<16x128xf32>
    %31 = tpu.iota {dimensions = array<i32: 1>} : vector<16x128xi32>
    %cst_18 = arith.constant dense<0xFF800000> : vector<16xf32>
    %32 = vector.multi_reduction <maximumf>, %30, %cst_18 [1] : vector<16x128xf32> to vector<16xf32>
    %33 = vector.shape_cast %32 : vector<16xf32> to vector<16x1xf32>
    %34 = vector.broadcast %33 : vector<16x1xf32> to vector<16x128xf32>
    %35 = arith.cmpf oeq, %30, %34 : vector<16x128xf32>
    %c128_i32 = arith.constant 128 : i32
    %36 = vector.broadcast %c128_i32 : i32 to vector<16x128xi32>
    %37 = arith.select %35, %31, %36 : vector<16x128xi1>, vector<16x128xi32>
    %cst_19 = arith.constant dense<2147483647> : vector<16xi32>
    %38 = vector.multi_reduction <minsi>, %37, %cst_19 [1] : vector<16x128xi32> to vector<16xi32>
    %39 = vector.shape_cast %38 : vector<16xi32> to vector<16x1xi32>
    %40 = tpu.transpose %39, [1, 0] : vector<16x1xi32> -> vector<1x16xi32>
    %c0_20 = arith.constant 0 : index
    %c0_21 = arith.constant 0 : index
    %41 = vector.load %arg9[%c0_20, %c0_21] : memref<1x16xi32, #tpu.memory_space<vmem>>, vector<1x16xi32>
    tpu.vector_store %arg9[%c0_20, %c0_21], %40 {strides = array<i32>} : memref<1x16xi32, #tpu.memory_space<vmem>>, vector<1x16xi32>,
    return
  }
  func.func @transform_0(%arg0: i32) -> (i32, i32) {
    %c0_i32 = arith.constant 0 : i32
    %c0_i32_0 = arith.constant 0 : i32
    return %arg0, %c0_i32 : i32, i32
  }
  func.func @transform_1(%arg0: i32) -> (i32, i32) {
    %c0_i32 = arith.constant 0 : i32
    %c0_i32_0 = arith.constant 0 : i32
    %c0_i32_1 = arith.constant 0 : i32
    return %c0_i32, %c0_i32_0 : i32, i32
  }
  func.func @transform_2(%arg0: i32) -> (i32, i32) {
    %c0_i32 = arith.constant 0 : i32
    %c0_i32_0 = arith.constant 0 : i32
    %c0_i32_1 = arith.constant 0 : i32
    return %c0_i32, %c0_i32_0 : i32, i32
  }
  func.func @transform_3(%arg0: i32) -> (i32, i32) {
    %c0_i32 = arith.constant 0 : i32
    %c0_i32_0 = arith.constant 0 : i32
    %c0_i32_1 = arith.constant 0 : i32
    return %c0_i32, %c0_i32_0 : i32, i32
  }
  func.func @transform_4(%arg0: i32) -> (i32, i32) {
    %c0_i32 = arith.constant 0 : i32
    %c0_i32_0 = arith.constant 0 : i32
    %c0_i32_1 = arith.constant 0 : i32
    return %c0_i32, %c0_i32_0 : i32, i32
  }
  func.func @transform_5(%arg0: i32) -> (i32, i32) {
    %c0_i32 = arith.constant 0 : i32
    %c0_i32_0 = arith.constant 0 : i32
    %c0_i32_1 = arith.constant 0 : i32
    return %c0_i32, %c0_i32_0 : i32, i32
  }
  func.func @transform_6(%arg0: i32) -> (i32, i32) {
    %c0_i32 = arith.constant 0 : i32
    %c0_i32_0 = arith.constant 0 : i32
    %c0_i32_1 = arith.constant 0 : i32
    return %c0_i32, %c0_i32_0 : i32, i32
  }
  func.func @transform_7(%arg0: i32) -> i32 {
    %c0_i32 = arith.constant 0 : i32
    %c0_i32_0 = arith.constant 0 : i32
    return %c0_i32 : i32
  }
  func.func @transform_8(%arg0: i32) -> (i32, i32) {
    %c0_i32 = arith.constant 0 : i32
    %c0_i32_0 = arith.constant 0 : i32
    return %arg0, %c0_i32 : i32, i32
  }
}

module attributes {stable_mosaic.version = 11 : i64} {
  func.func @seq_labeler_kernel(%arg0: i32, %arg1: memref<16x32xf32, #tpu.memory_space<vmem>>, %arg2: memref<32x256xbf16, #tpu.memory_space<vmem>>, %arg3: memref<1x256xf32, #tpu.memory_space<vmem>>, %arg4: memref<256x256xbf16, #tpu.memory_space<vmem>>, %arg5: memref<1x256xf32, #tpu.memory_space<vmem>>, %arg6: memref<256x128xbf16, #tpu.memory_space<vmem>>, %arg7: memref<1x128xf32, #tpu.memory_space<vmem>>, %arg8: memref<2xf32, #tpu.memory_space<smem>>, %arg9: memref<1x16xi32, #tpu.memory_space<vmem>>) attributes {dimension_semantics = [#tpu.dimension_semantics<parallel>], iteration_bounds = array<i64: 1>, scalar_prefetch = 0 : i64, scratch_operands = 0 : i64, tpu.core_type = #tpu.core_type<tc>, window_params = [{transform_indices = @transform_0, window_bounds = array<i64: 16, 32>}, {pipeline_mode = #tpu.pipeline_mode<synchronous>, transform_indices = @transform_1, window_bounds = array<i64: 32, 256>}, {pipeline_mode = #tpu.pipeline_mode<synchronous>, transform_indices = @transform_2, window_bounds = array<i64: 1, 256>}, {pipeline_mode = #tpu.pipeline_mode<synchronous>, transform_indices = @transform_3, window_bounds = array<i64: 256, 256>}, {pipeline_mode = #tpu.pipeline_mode<synchronous>, transform_indices = @transform_4, window_bounds = array<i64: 1, 256>}, {pipeline_mode = #tpu.pipeline_mode<synchronous>, transform_indices = @transform_5, window_bounds = array<i64: 256, 128>}, {pipeline_mode = #tpu.pipeline_mode<synchronous>, transform_indices = @transform_6, window_bounds = array<i64: 1, 128>}, {transform_indices = @transform_7, window_bounds = array<i64: 2>}, {transform_indices = @transform_8, window_bounds = array<i64: 1, 16>}]} {
    %c0 = arith.constant 0 : index
    %c0_0 = arith.constant 0 : index
    %0 = vector.load %arg1[%c0, %c0_0] : memref<16x32xf32, #tpu.memory_space<vmem>>, vector<16x32xf32>
    %1 = arith.truncf %0 : vector<16x32xf32> to vector<16x32xbf16>
    %c0_1 = arith.constant 0 : index
    %2 = memref.load %arg8[%c0_1] : memref<2xf32, #tpu.memory_space<smem>>
    %c1 = arith.constant 1 : index
    %3 = memref.load %arg8[%c1] : memref<2xf32, #tpu.memory_space<smem>>
    %c0_2 = arith.constant 0 : index
    %c0_3 = arith.constant 0 : index
    %4 = vector.load %arg2[%c0_2, %c0_3] : memref<32x256xbf16, #tpu.memory_space<vmem>>, vector<32x256xbf16>
    %cst = arith.constant dense<0.000000e+00> : vector<16x256xf32>
    %5 = tpu.matmul %1, %4, %cst {dimension_numbers = #tpu.dot_dimension_numbers<[1], [0], [0], [1], [0, 0, 1, 1], [], []>} : vector<16x32xbf16>, vector<32x256xbf16>, vector<16x256xf32> -> vector<16x256xf32>
    %c0_4 = arith.constant 0 : index
    %c0_5 = arith.constant 0 : index
    %6 = vector.load %arg3[%c0_4, %c0_5] : memref<1x256xf32, #tpu.memory_space<vmem>>, vector<1x256xf32>
    %7 = vector.broadcast %6 : vector<1x256xf32> to vector<16x256xf32>
    %8 = arith.addf %5, %7 : vector<16x256xf32>
    %cst_6 = arith.constant 0.000000e+00 : f32
    %9 = vector.broadcast %cst_6 : f32 to vector<16x256xf32>
    %10 = arith.cmpf ogt, %8, %9 : vector<16x256xf32>
    %11 = vector.broadcast %2 : f32 to vector<16x256xf32>
    %12 = arith.mulf %11, %8 : vector<16x256xf32>
    %13 = arith.select %10, %8, %12 : vector<16x256xi1>, vector<16x256xf32>
    %14 = arith.truncf %13 : vector<16x256xf32> to vector<16x256xbf16>
    %c0_7 = arith.constant 0 : index
    %c0_8 = arith.constant 0 : index
    %15 = vector.load %arg4[%c0_7, %c0_8] : memref<256x256xbf16, #tpu.memory_space<vmem>>, vector<256x256xbf16>
    %cst_9 = arith.constant dense<0.000000e+00> : vector<16x256xf32>
    %16 = tpu.matmul %14, %15, %cst_9 {dimension_numbers = #tpu.dot_dimension_numbers<[1], [0], [0], [1], [0, 0, 1, 1], [], []>} : vector<16x256xbf16>, vector<256x256xbf16>, vector<16x256xf32> -> vector<16x256xf32>
    %c0_10 = arith.constant 0 : index
    %c0_11 = arith.constant 0 : index
    %17 = vector.load %arg5[%c0_10, %c0_11] : memref<1x256xf32, #tpu.memory_space<vmem>>, vector<1x256xf32>
    %18 = vector.broadcast %17 : vector<1x256xf32> to vector<16x256xf32>
    %19 = arith.addf %16, %18 : vector<16x256xf32>
    %cst_12 = arith.constant 0.000000e+00 : f32
    %20 = vector.broadcast %cst_12 : f32 to vector<16x256xf32>
    %21 = arith.cmpf ogt, %19, %20 : vector<16x256xf32>
    %22 = vector.broadcast %3 : f32 to vector<16x256xf32>
    %23 = arith.mulf %22, %19 : vector<16x256xf32>
    %24 = arith.select %21, %19, %23 : vector<16x256xi1>, vector<16x256xf32>
    %25 = arith.truncf %24 : vector<16x256xf32> to vector<16x256xbf16>
    %c0_13 = arith.constant 0 : index
    %c0_14 = arith.constant 0 : index
    %26 = vector.load %arg6[%c0_13, %c0_14] : memref<256x128xbf16, #tpu.memory_space<vmem>>, vector<256x128xbf16>
    %cst_15 = arith.constant dense<0.000000e+00> : vector<16x128xf32>
    %27 = tpu.matmul %25, %26, %cst_15 {dimension_numbers = #tpu.dot_dimension_numbers<[1], [0], [0], [1], [0, 0, 1, 1], [], []>} : vector<16x256xbf16>, vector<256x128xbf16>, vector<16x128xf32> -> vector<16x128xf32>
    %c0_16 = arith.constant 0 : index
    %c0_17 = arith.constant 0 : index
    %28 = vector.load %arg7[%c0_16, %c0_17] : memref<1x128xf32, #tpu.memory_space<vmem>>, vector<1x128xf32>
    %29 = vector.broadcast %28 : vector<1x128xf32> to vector<16x128xf32>
    %30 = arith.addf %27, %29 : vector<16x128xf32>
    %31 = tpu.iota {dimensions = array<i32: 1>} : vector<16x128xi32>
    %cst_18 = arith.constant dense<0xFF800000> : vector<16xf32>
    %32 = vector.multi_reduction <maximumf>, %30, %cst_18 [1] : vector<16x128xf32> to vector<16xf32>
    %33 = vector.shape_cast %32 : vector<16xf32> to vector<16x1xf32>
    %34 = vector.broadcast %33 : vector<16x1xf32> to vector<16x128xf32>
    %35 = arith.cmpf oeq, %30, %34 : vector<16x128xf32>
    %c128_i32 = arith.constant 128 : i32
    %36 = vector.broadcast %c128_i32 : i32 to vector<16x128xi32>
    %37 = arith.select %35, %31, %36 : vector<16x128xi1>, vector<16x128xi32>
    %cst_19 = arith.constant dense<2147483647> : vector<16xi32>
    %38 = vector.multi_reduction <minsi>, %37, %cst_19 [1] : vector<16x128xi32> to vector<16xi32>
    %39 = vector.shape_cast %38 : vector<16xi32> to vector<16x1xi32>
    %40 = tpu.transpose %39, [1, 0] : vector<16x1xi32> -> vector<1x16xi32>
    %c0_20 = arith.constant 0 : index
    %c0_21 = arith.constant 0 : index
    %41 = vector.load %arg9[%c0_20, %c0_21] : memref<1x16xi32, #tpu.memory_space<vmem>>, vector<1x16xi32>
    tpu.vector_store %arg9[%c0_20, %c0_21], %40 {strides = array<i32>} : memref<1x16xi32, #tpu.memory_space<vmem>>, vector<1x16xi32>,
    return
  }
  func.func @transform_0(%arg0: i32) -> (i32, i32) {
    %c0_i32 = arith.constant 0 : i32
    %c0_i32_0 = arith.constant 0 : i32
    return %arg0, %c0_i32 : i32, i32
  }
  func.func @transform_1(%arg0: i32) -> (i32, i32) {
    %c0_i32 = arith.constant 0 : i32
    %c0_i32_0 = arith.constant 0 : i32
    %c0_i32_1 = arith.constant 0 : i32
    return %c0_i32, %c0_i32_0 : i32, i32
  }
  func.func @transform_2(%arg0: i32) -> (i32, i32) {
    %c0_i32 = arith.constant 0 : i32
    %c0_i32_0 = arith.constant 0 : i32
    %c0_i32_1 = arith.constant 0 : i32
    return %c0_i32, %c0_i32_0 : i32, i32
  }
  func.func @transform_3(%arg0: i32) -> (i32, i32) {
    %c0_i32 = arith.constant 0 : i32
    %c0_i32_0 = arith.constant 0 : i32
    %c0_i32_1 = arith.constant 0 : i32
    return %c0_i32, %c0_i32_0 : i32, i32
  }
  func.func @transform_4(%arg0: i32) -> (i32, i32) {
    %c0_i32 = arith.constant 0 : i32
    %c0_i32_0 = arith.constant 0 : i32
    %c0_i32_1 = arith.constant 0 : i32
    return %c0_i32, %c0_i32_0 : i32, i32
  }
  func.func @transform_5(%arg0: i32) -> (i32, i32) {
    %c0_i32 = arith.constant 0 : i32
    %c0_i32_0 = arith.constant 0 : i32
    %c0_i32_1 = arith.constant 0 : i32
    return %c0_i32, %c0_i32_0 : i32, i32
  }
  func.func @transform_6(%arg0: i32) -> (i32, i32) {
    %c0_i32 = arith.constant 0 : i32
    %c0_i32_0 = arith.constant 0 : i32
    %c0_i32_1 = arith.constant 0 : i32
    return %c0_i32, %c0_i32_0 : i32, i32
  }
  func.func @transform_7(%arg0: i32) -> i32 {
    %c0_i32 = arith.constant 0 : i32
    %c0_i32_0 = arith.constant 0 : i32
    return %c0_i32 : i32
  }
  func.func @transform_8(%arg0: i32) -> (i32, i32) {
    %c0_i32 = arith.constant 0 : i32
    %c0_i32_0 = arith.constant 0 : i32
    return %arg0, %c0_i32 : i32, i32
  }
}

</mosaic_0001>

<llo_original>
// kernel: tpu_custom_call.1
$region0: #{tpu_custom_call.1}
  #allocation0 [shape = 'u32[]', space=smem, size = 0x4, offset = 0x4, fixed_abs, tag = 'smem constant byte address 0x4 - core index']
  #allocation1 [shape = 'u32[144,128]{1,0:T(1,128)}', space=vmem, size = 0x12000, scoped, tag = 'internal scratch']
  %s0 = inlined_call_operand.hbm [shape: f32[16,32], index: 0, kind: input, shape index: {}]
  %s1 = inlined_call_operand.hbm [shape: bf16[32,256], index: 1, kind: input, shape index: {}]
  %s2 = inlined_call_operand.vmem [shape: f32[1,256], index: 2, kind: input, shape index: {}]
  %s3 = inlined_call_operand.hbm [shape: bf16[256,256], index: 3, kind: input, shape index: {}]
  %s4 = inlined_call_operand.vmem [shape: f32[1,256], index: 4, kind: input, shape index: {}]
  %s5 = inlined_call_operand.hbm [shape: bf16[256,128], index: 5, kind: input, shape index: {}]
  %s6 = inlined_call_operand.vmem [shape: f32[1,128], index: 6, kind: input, shape index: {}]
  %s7 = inlined_call_operand.vmem [shape: f32[2], index: 7, kind: input, shape index: {}]
  %s8 = inlined_call_operand.hbm [shape: s32[1,16], index: 8, kind: output, shape index: {}]
  %s9 = sld [smem:[#allocation0]]
  $region62: #{tpu_custom_call.1} parent=0
    _
  %s11 = ssub.s32 1, %s9
  %s12 = scalar_select 0, %s11, %s9
  $region1: #{tpu_custom_call.1} parent=0
    #allocation2 [shape = 'u8[8192]{0}', space=vmem, size = 0x2000, scoped, tag = 'input window, operand 0, single buffered']
    #allocation3 [shape = 's32[1]{0}', space=sflag, size = 0x4, scoped, tag = 'scoped memory for tpu_custom_call.1']
    #allocation4 [shape = 's32[1]{0}', space=sflag, size = 0x4, scoped, tag = 'scoped memory for tpu_custom_call.1']
    #allocation5 [shape = 's32[1]{0}', space=sflag, size = 0x4, scoped, tag = 'scoped memory for tpu_custom_call.1']
    #allocation6 [shape = 'u8[16384]{0}', space=vmem, size = 0x4000, scoped, tag = 'input window, operand 1, single buffered']
    #allocation7 [shape = 's32[1]{0}', space=sflag, size = 0x4, scoped, tag = 'scoped memory for tpu_custom_call.1']
    #allocation8 [shape = 'u8[131072]{0}', space=vmem, size = 0x20000, scoped, tag = 'input window, operand 3, single buffered']
    #allocation9 [shape = 'u8[65536]{0}', space=vmem, size = 0x10000, scoped, tag = 'input window, operand 5, single buffered']
    #allocation10 [shape = 's32[1]{0}', space=sflag, size = 0x4, scoped, tag = 'scoped memory for tpu_custom_call.1']
    #allocation11 [shape = 'u8[512]{0}', space=smem, size = 0x200, scoped, tag = 'input window, operand 7, single buffered']
    #allocation12 [shape = 'u8[512]{0}', space=vmem, size = 0x400, scoped, tag = 'output window, operand 0, single buffered']
    %13 = vsyncpa [#allocation3], 0
    %14 = vsyncpa [#allocation7], 0
    %15 = vsyncpa [#allocation10], 0
    %16 = vsyncpa [#allocation5], 0
    %17 = vsyncpa [#allocation4], 0
    // Predicated region
    $region2: #{tpu_custom_call.1} parent=1 // pred_check
      _
    $region3: #{tpu_custom_call.1} parent=1 // pred_check_branch
      %19 = sbr.rel (0) target = $region5
    $region4: #{tpu_custom_call.1} parent=1 // pred_region
      %s21 = ssub.s32 256, 256
      %22 = vsyncadd [#allocation3], %s21
      %s23 = sshll.u32 [#allocation2], 4
      %s24 = int_to_ptr.vmem [resolvable:$true] %s23
      %29 = dma.hbm_to_vmem [thread:$0]  %s0, 256, %s24, [#allocation3], 128, 128, 8
    $region5: #{tpu_custom_call.1} parent=1 // pred_fallthru
      _
    // Predicated region
    $region6: #{tpu_custom_call.1} parent=1 // pred_check
      _
    $region7: #{tpu_custom_call.1} parent=1 // pred_check_branch
      %31 = sbr.rel (0) target = $region9
    $region8: #{tpu_custom_call.1} parent=1 // pred_region
      %s33 = ssub.s32 512, 512
      %34 = vsyncadd [#allocation7], %s33
      %s35 = sshll.u32 [#allocation6], 4
      %s36 = int_to_ptr.vmem [resolvable:$true] %s35
      %41 = dma.hbm_to_vmem [thread:$0]  %s1, 512, %s36, [#allocation7], 128, 128, 8
    $region9: #{tpu_custom_call.1} parent=1 // pred_fallthru
      _
    // Predicated region
    $region10: #{tpu_custom_call.1} parent=1 // pred_check
      _
    $region11: #{tpu_custom_call.1} parent=1 // pred_check_branch
      %43 = sbr.rel (0) target = $region13
    $region12: #{tpu_custom_call.1} parent=1 // pred_region
      _
    $region13: #{tpu_custom_call.1} parent=1 // pred_fallthru
      _
    // Predicated region
    $region14: #{tpu_custom_call.1} parent=1 // pred_check
      _
    $region15: #{tpu_custom_call.1} parent=1 // pred_check_branch
      %45 = sbr.rel (0) target = $region17
    $region16: #{tpu_custom_call.1} parent=1 // pred_region
      %s47 = ssub.s32 4096, 4096
      %48 = vsyncadd [#allocation7], %s47
      %s49 = sshll.u32 [#allocation8], 4
      %s50 = int_to_ptr.vmem [resolvable:$true] %s49
      %55 = dma.hbm_to_vmem [thread:$0]  %s3, 4096, %s50, [#allocation7], 128, 128, 8
    $region17: #{tpu_custom_call.1} parent=1 // pred_fallthru
      _
    // Predicated region
    $region18: #{tpu_custom_call.1} parent=1 // pred_check
      _
    $region19: #{tpu_custom_call.1} parent=1 // pred_check_branch
      %57 = sbr.rel (0) target = $region21
    $region20: #{tpu_custom_call.1} parent=1 // pred_region
      _
    $region21: #{tpu_custom_call.1} parent=1 // pred_fallthru
      _
    // Predicated region
    $region22: #{tpu_custom_call.1} parent=1 // pred_check
      _
    $region23: #{tpu_custom_call.1} parent=1 // pred_check_branch
      %59 = sbr.rel (0) target = $region25
    $region24: #{tpu_custom_call.1} parent=1 // pred_region
      %s61 = ssub.s32 2048, 2048
      %62 = vsyncadd [#allocation10], %s61
      %s63 = sshll.u32 [#allocation9], 4
      %s64 = int_to_ptr.vmem [resolvable:$true] %s63
      %69 = dma.hbm_to_vmem [thread:$0]  %s5, 2048, %s64, [#allocation10], 64, 64, 4
    $region25: #{tpu_custom_call.1} parent=1 // pred_fallthru
      _
    // Predicated region
    $region26: #{tpu_custom_call.1} parent=1 // pred_check
      _
    $region27: #{tpu_custom_call.1} parent=1 // pred_check_branch
      %71 = sbr.rel (0) target = $region29
    $region28: #{tpu_custom_call.1} parent=1 // pred_region
      _
    $region29: #{tpu_custom_call.1} parent=1 // pred_fallthru
      _
    // Predicated region
    $region30: #{tpu_custom_call.1} parent=1 // pred_check
      _
    $region31: #{tpu_custom_call.1} parent=1 // pred_check_branch
      %73 = sbr.rel (0) target = $region33
    $region32: #{tpu_custom_call.1} parent=1 // pred_region
      %s75 = ssub.s32 16, 16
      %76 = vsyncadd [#allocation5], %s75
      %s78 = sshll.u32 %s7, 4
      %s79 = int_to_ptr.vmem [resolvable:$true] %s78
      %81 = dma.vmem_to_smem %s79, 16, [#allocation11], [#allocation5]
    $region33: #{tpu_custom_call.1} parent=1 // pred_fallthru
      _
    // Predicated region
    $region34: #{tpu_custom_call.1} parent=1 // pred_check
      _
    $region35: #{tpu_custom_call.1} parent=1 // pred_check_branch
      %83 = sbr.rel (0) target = $region37
    $region36: #{tpu_custom_call.1} parent=1 // pred_region
      %84 = dma.done [#allocation3], 256
    $region37: #{tpu_custom_call.1} parent=1 // pred_fallthru
      _
    // Predicated region
    $region38: #{tpu_custom_call.1} parent=1 // pred_check
      _
    $region39: #{tpu_custom_call.1} parent=1 // pred_check_branch
      %86 = sbr.rel (0) target = $region41
    $region40: #{tpu_custom_call.1} parent=1 // pred_region
      %87 = dma.done [#allocation7], 512
    $region41: #{tpu_custom_call.1} parent=1 // pred_fallthru
      _
    // Predicated region
    $region42: #{tpu_custom_call.1} parent=1 // pred_check
      _
    $region43: #{tpu_custom_call.1} parent=1 // pred_check_branch
      %89 = sbr.rel (0) target = $region45
    $region44: #{tpu_custom_call.1} parent=1 // pred_region
      %90 = dma.done [#allocation7], 4096
    $region45: #{tpu_custom_call.1} parent=1 // pred_fallthru
      _
    // Predicated region
    $region46: #{tpu_custom_call.1} parent=1 // pred_check
      _
    $region47: #{tpu_custom_call.1} parent=1 // pred_check_branch
      %92 = sbr.rel (0) target = $region49
    $region48: #{tpu_custom_call.1} parent=1 // pred_region
      %93 = dma.done [#allocation10], 2048
    $region49: #{tpu_custom_call.1} parent=1 // pred_fallthru
      _
    // Predicated region
    $region50: #{tpu_custom_call.1} parent=1 // pred_check
      _
    $region51: #{tpu_custom_call.1} parent=1 // pred_check_branch
      %95 = sbr.rel (0) target = $region53
    $region52: #{tpu_custom_call.1} parent=1 // pred_region
      %96 = dma.done [#allocation5], 16
    $region53: #{tpu_custom_call.1} parent=1 // pred_fallthru
      _
    %97 = sfence
    %v99 = vld [vmem:[#allocation2] sm:$0xff]
    %v100 = vld [vmem:[#allocation2 + $0x8] sm:$0xff]
    %v101 = vpack.c.bf16 %v100, %v99
    %s102 = sld [smem:[#allocation11]]
    %s103 = sld [smem:[#allocation11 + $0x1]]
    %v104 = vld [vmem:[#allocation6] sm:$0xff]
    %v105 = vld [vmem:[#allocation6 + $0x8] sm:$0xff]
    %v106 = vld [vmem:[#allocation6 + $0x10] sm:$0xff]
    %v107 = vld [vmem:[#allocation6 + $0x18] sm:$0xff]
    %v108 = vld [vmem:[%s2] sm:$0x3]
    %v110 = vlaneseq
    %v111 = vshrl.u32 %v110, 7
    %v112 = vsub.s32 0, %v111
    %v113 = vrot.slane %v108, %v112
    %v114 = vlaneseq
    %v115 = vshrl.u32 %v114, 7
    %v116 = vsub.s32 1, %v115
    %v117 = vrot.slane %v108, %v116
    %v124 = vunpack.c.l.b16 %v104
    %v125 = vunpack.c.h.b16 %v104
    %v126 = vunpack.c.l.b16 %v105
    %v127 = vunpack.c.h.b16 %v105
    %v128 = vunpack.c.l.b16 %v106
    %v129 = vunpack.c.h.b16 %v106
    %v130 = vunpack.c.l.b16 %v107
    %v131 = vunpack.c.h.b16 %v107
    %v132 = vpack.c.b16 %v126, %v124
    %v133 = vpack.c.b16 %v127, %v125
    %v134 = vpack.c.b16 %v130, %v128
    %v135 = vpack.c.b16 %v131, %v129
    %vm140 = vcmask 261120
    %v142 = vsel %vm140, %v101, 0
    %144 = vmatprep.subr.bf16.mxu0 0
    %145 = vmatpush1.bf16.msra.mxu0 0
    %146 = vmatprep.subr.bf16.mxu0 0
    %147 = vmatpush1.bf16.msra.mxu0 0
    %148 = vmatprep.subr.bf16.mxu0 0
    %149 = vmatpush1.bf16.msra.mxu0 0
    %150 = vmatprep.subr.bf16.mxu0 0
    %151 = vmatpush1.bf16.msra.mxu0 0
    %152 = vmatprep.subr.bf16.mxu0 0
    %153 = vmatpush1.bf16.msra.mxu0 0
    %154 = vmatprep.subr.bf16.mxu0 0
    %155 = vmatpush1.bf16.msra.mxu0 0
    %156 = vmatprep.subr.bf16.mxu0 %v135
    %157 = vmatpush1.bf16.msra.mxu0 %v134
    %158 = vmatprep.subr.bf16.mxu0 %v133
    %159 = vmatpush1.bf16.msra.mxu0 %v132
    %160 = vmatprep.subr.bf16.mxu0 0
    %161 = vmatpush2.bf16.msra.mxu0 0
    %162 = vmatprep.subr.bf16.mxu0 0
    %163 = vmatpush2.bf16.msra.mxu0 0
    %164 = vmatprep.subr.bf16.mxu0 0
    %165 = vmatpush2.bf16.msra.mxu0 0
    %166 = vmatprep.subr.bf16.mxu0 0
    %167 = vmatpush2.bf16.msra.mxu0 0
    %168 = vmatprep.subr.bf16.mxu0 0
    %169 = vmatpush2.bf16.msra.mxu0 0
    %170 = vmatprep.subr.bf16.mxu0 0
    %171 = vmatpush2.bf16.msra.mxu0 0
    %172 = vmatprep.subr.bf16.mxu0 0
    %173 = vmatpush2.bf16.msra.mxu0 0
    %174 = vmatprep.subr.bf16.mxu0 0
    %175 = vmatpush2.bf16.msra.mxu0 0
    %176 = vmatprep.mubr.bf16.mxu0 0
    %177 = vmatmul.mubr.bf16.gmra.mxu0 %v142
    %v178 = vpop.f32.mrf.mxu0
    %v179 = vadd.f32 %v113, %v178
    %v180 = vpop.f32.mrf.mxu0
    %v181 = vadd.f32 %v117, %v180
    %v182 = vpop.f32.mrf.mxu0
    %v183 = vadd.f32 %v113, %v182
    %v184 = vpop.f32.mrf.mxu0
    %v185 = vadd.f32 %v117, %v184
    %186 = vdwg.mxu0
    %vm187 = vcmp.gt.f32.partialorder %v179, 0.0
    %vm188 = vcmp.gt.f32.partialorder %v181, 0.0
    %vm189 = vcmp.gt.f32.partialorder %v183, 0.0
    %vm190 = vcmp.gt.f32.partialorder %v185, 0.0
    %v191 = vstv %s102
    %v192 = vmul.f32 %v191, %v179
    %v193 = vmul.f32 %v191, %v181
    %v194 = vmul.f32 %v191, %v183
    %v195 = vmul.f32 %v191, %v185
    %v196 = vsel %vm187, %v179, %v192
    %v197 = vsel %vm188, %v181, %v193
    %v198 = vsel %vm189, %v183, %v194
    %v199 = vsel %vm190, %v185, %v195
    %v200 = vpack.c.bf16 %v198, %v196
    %v201 = vpack.c.bf16 %v199, %v197
    %v202 = vld [vmem:[#allocation8] sm:$0xff]
    %v203 = vld [vmem:[#allocation8 + $0x8] sm:$0xff]
    %v204 = vld [vmem:[#allocation8 + $0x10] sm:$0xff]
    %v205 = vld [vmem:[#allocation8 + $0x18] sm:$0xff]
    %v206 = vld [vmem:[#allocation8 + $0x20] sm:$0xff]
    %v207 = vld [vmem:[#allocation8 + $0x28] sm:$0xff]
    %v208 = vld [vmem:[#allocation8 + $0x30] sm:$0xff]
    %v209 = vld [vmem:[#allocation8 + $0x38] sm:$0xff]
    %v210 = vld [vmem:[#allocation8 + $0x40] sm:$0xff]
    %v211 = vld [vmem:[#allocation8 + $0x48] sm:$0xff]
    %v212 = vld [vmem:[#allocation8 + $0x50] sm:$0xff]
    %v213 = vld [vmem:[#allocation8 + $0x58] sm:$0xff]
    %v214 = vld [vmem:[#allocation8 + $0x60] sm:$0xff]
    %v215 = vld [vmem:[#allocation8 + $0x68] sm:$0xff]
    %v216 = vld [vmem:[#allocation8 + $0x70] sm:$0xff]
    %v217 = vld [vmem:[#allocation8 + $0x78] sm:$0xff]
    %v218 = vld [vmem:[#allocation8 + $0x80] sm:$0xff]
    %v219 = vld [vmem:[#allocation8 + $0x88] sm:$0xff]
    %v220 = vld [vmem:[#allocation8 + $0x90] sm:$0xff]
    %v221 = vld [vmem:[#allocation8 + $0x98] sm:$0xff]
    %v222 = vld [vmem:[#allocation8 + $0xa0] sm:$0xff]
    %v223 = vld [vmem:[#allocation8 + $0xa8] sm:$0xff]
    %v224 = vld [vmem:[#allocation8 + $0xb0] sm:$0xff]
    %v225 = vld [vmem:[#allocation8 + $0xb8] sm:$0xff]
    %v226 = vld [vmem:[#allocation8 + $0xc0] sm:$0xff]
    %v227 = vld [vmem:[#allocation8 + $0xc8] sm:$0xff]
    %v228 = vld [vmem:[#allocation8 + $0xd0] sm:$0xff]
    %v229 = vld [vmem:[#allocation8 + $0xd8] sm:$0xff]
    %v230 = vld [vmem:[#allocation8 + $0xe0] sm:$0xff]
    %v231 = vld [vmem:[#allocation8 + $0xe8] sm:$0xff]
    %v232 = vld [vmem:[#allocation8 + $0xf0] sm:$0xff]
    %v233 = vld [vmem:[#allocation8 + $0xf8] sm:$0xff]
    %v234 = vld [vmem:[%s4] sm:$0x3]
    %v236 = vlaneseq
    %v237 = vshrl.u32 %v236, 7
    %v238 = vsub.s32 0, %v237
    %v239 = vrot.slane %v234, %v238
    %v240 = vlaneseq
    %v241 = vshrl.u32 %v240, 7
    %v242 = vsub.s32 1, %v241
    %v243 = vrot.slane %v234, %v242
    %v278 = vunpack.c.l.b16 %v202
    %v279 = vunpack.c.h.b16 %v202
    %v280 = vunpack.c.l.b16 %v203
    %v281 = vunpack.c.h.b16 %v203
    %v282 = vunpack.c.l.b16 %v204
    %v283 = vunpack.c.h.b16 %v204
    %v284 = vunpack.c.l.b16 %v205
    %v285 = vunpack.c.h.b16 %v205
    %v286 = vunpack.c.l.b16 %v206
    %v287 = vunpack.c.h.b16 %v206
    %v288 = vunpack.c.l.b16 %v207
    %v289 = vunpack.c.h.b16 %v207
    %v290 = vunpack.c.l.b16 %v208
    %v291 = vunpack.c.h.b16 %v208
    %v292 = vunpack.c.l.b16 %v209
    %v293 = vunpack.c.h.b16 %v209
    %v294 = vunpack.c.l.b16 %v210
    %v295 = vunpack.c.h.b16 %v210
    %v296 = vunpack.c.l.b16 %v211
    %v297 = vunpack.c.h.b16 %v211
    %v298 = vunpack.c.l.b16 %v212
    %v299 = vunpack.c.h.b16 %v212
    %v300 = vunpack.c.l.b16 %v213
    %v301 = vunpack.c.h.b16 %v213
    %v302 = vunpack.c.l.b16 %v214
    %v303 = vunpack.c.h.b16 %v214
    %v304 = vunpack.c.l.b16 %v215
    %v305 = vunpack.c.h.b16 %v215
    %v306 = vunpack.c.l.b16 %v216
    %v307 = vunpack.c.h.b16 %v216
    %v308 = vunpack.c.l.b16 %v217
    %v309 = vunpack.c.h.b16 %v217
    %v310 = vunpack.c.l.b16 %v218
    %v311 = vunpack.c.h.b16 %v218
    %v312 = vunpack.c.l.b16 %v219
    %v313 = vunpack.c.h.b16 %v219
    %v314 = vunpack.c.l.b16 %v220
    %v315 = vunpack.c.h.b16 %v220
    %v316 = vunpack.c.l.b16 %v221
    %v317 = vunpack.c.h.b16 %v221
    %v318 = vunpack.c.l.b16 %v222
    %v319 = vunpack.c.h.b16 %v222
    %v320 = vunpack.c.l.b16 %v223
    %v321 = vunpack.c.h.b16 %v223
    %v322 = vunpack.c.l.b16 %v224
    %v323 = vunpack.c.h.b16 %v224
    %v324 = vunpack.c.l.b16 %v225
    %v325 = vunpack.c.h.b16 %v225
    %v326 = vunpack.c.l.b16 %v226
    %v327 = vunpack.c.h.b16 %v226
    %v328 = vunpack.c.l.b16 %v227
    %v329 = vunpack.c.h.b16 %v227
    %v330 = vunpack.c.l.b16 %v228
    %v331 = vunpack.c.h.b16 %v228
    %v332 = vunpack.c.l.b16 %v229
    %v333 = vunpack.c.h.b16 %v229
    %v334 = vunpack.c.l.b16 %v230
    %v335 = vunpack.c.h.b16 %v230
    %v336 = vunpack.c.l.b16 %v231
    %v337 = vunpack.c.h.b16 %v231
    %v338 = vunpack.c.l.b16 %v232
    %v339 = vunpack.c.h.b16 %v232
    %v340 = vunpack.c.l.b16 %v233
    %v341 = vunpack.c.h.b16 %v233
    %v342 = vpack.c.b16 %v280, %v278
    %v343 = vpack.c.b16 %v281, %v279
    %v344 = vpack.c.b16 %v284, %v282
    %v345 = vpack.c.b16 %v285, %v283
    %v346 = vpack.c.b16 %v288, %v286
    %v347 = vpack.c.b16 %v289, %v287
    %v348 = vpack.c.b16 %v292, %v290
    %v349 = vpack.c.b16 %v293, %v291
    %v350 = vpack.c.b16 %v296, %v294
    %v351 = vpack.c.b16 %v297, %v295
    %v352 = vpack.c.b16 %v300, %v298
    %v353 = vpack.c.b16 %v301, %v299
    %v354 = vpack.c.b16 %v304, %v302
    %v355 = vpack.c.b16 %v305, %v303
    %v356 = vpack.c.b16 %v308, %v306
    %v357 = vpack.c.b16 %v309, %v307
    %v358 = vpack.c.b16 %v312, %v310
    %v359 = vpack.c.b16 %v313, %v311
    %v360 = vpack.c.b16 %v316, %v314
    %v361 = vpack.c.b16 %v317, %v315
    %v362 = vpack.c.b16 %v320, %v318
    %v363 = vpack.c.b16 %v321, %v319
    %v364 = vpack.c.b16 %v324, %v322
    %v365 = vpack.c.b16 %v325, %v323
    %v366 = vpack.c.b16 %v328, %v326
    %v367 = vpack.c.b16 %v329, %v327
    %v368 = vpack.c.b16 %v332, %v330
    %v369 = vpack.c.b16 %v333, %v331
    %v370 = vpack.c.b16 %v336, %v334
    %v371 = vpack.c.b16 %v337, %v335
    %v372 = vpack.c.b16 %v340, %v338
    %v373 = vpack.c.b16 %v341, %v339
    %406 = vmatprep.subr.bf16.mxu0 %v357
    %407 = vmatpush1.bf16.msra.mxu0 %v356
    %408 = vmatprep.subr.bf16.mxu0 %v355
    %409 = vmatpush1.bf16.msra.mxu0 %v354
    %410 = vmatprep.subr.bf16.mxu0 %v353
    %411 = vmatpush1.bf16.msra.mxu0 %v352
    %412 = vmatprep.subr.bf16.mxu0 %v351
    %413 = vmatpush1.bf16.msra.mxu0 %v350
    %414 = vmatprep.subr.bf16.mxu0 %v349
    %415 = vmatpush1.bf16.msra.mxu0 %v348
    %416 = vmatprep.subr.bf16.mxu0 %v347
    %417 = vmatpush1.bf16.msra.mxu0 %v346
    %418 = vmatprep.subr.bf16.mxu0 %v345
    %419 = vmatpush1.bf16.msra.mxu0 %v344
    %420 = vmatprep.subr.bf16.mxu0 %v343
    %421 = vmatpush1.bf16.msra.mxu0 %v342
    %422 = vmatprep.subr.bf16.mxu0 %v373
    %423 = vmatpush2.bf16.msra.mxu0 %v372
    %424 = vmatprep.subr.bf16.mxu0 %v371
    %425 = vmatpush2.bf16.msra.mxu0 %v370
    %426 = vmatprep.subr.bf16.mxu0 %v369
    %427 = vmatpush2.bf16.msra.mxu0 %v368
    %428 = vmatprep.subr.bf16.mxu0 %v367
    %429 = vmatpush2.bf16.msra.mxu0 %v366
    %430 = vmatprep.subr.bf16.mxu0 %v365
    %431 = vmatpush2.bf16.msra.mxu0 %v364
    %432 = vmatprep.subr.bf16.mxu0 %v363
    %433 = vmatpush2.bf16.msra.mxu0 %v362
    %434 = vmatprep.subr.bf16.mxu0 %v361
    %435 = vmatpush2.bf16.msra.mxu0 %v360
    %436 = vmatprep.subr.bf16.mxu0 %v359
    %437 = vmatpush2.bf16.msra.mxu0 %v358
    %438 = vmatprep.mubr.bf16.mxu0 %v201
    %439 = vmatmul.mubr.bf16.gmra.mxu0 %v200
    %v440 = vpop.f32.mrf.mxu0
    %v441 = vadd.f32 %v239, %v440
    %v442 = vpop.f32.mrf.mxu0
    %v443 = vadd.f32 %v243, %v442
    %v444 = vpop.f32.mrf.mxu0
    %v445 = vadd.f32 %v239, %v444
    %v446 = vpop.f32.mrf.mxu0
    %v447 = vadd.f32 %v243, %v446
    %448 = vdwg.mxu0
    %vm449 = vcmp.gt.f32.partialorder %v441, 0.0
    %vm450 = vcmp.gt.f32.partialorder %v443, 0.0
    %vm451 = vcmp.gt.f32.partialorder %v445, 0.0
    %vm452 = vcmp.gt.f32.partialorder %v447, 0.0
    %v453 = vstv %s103
    %v454 = vmul.f32 %v453, %v441
    %v455 = vmul.f32 %v453, %v443
    %v456 = vmul.f32 %v453, %v445
    %v457 = vmul.f32 %v453, %v447
    %v458 = vsel %vm449, %v441, %v454
    %v459 = vsel %vm450, %v443, %v455
    %v460 = vsel %vm451, %v445, %v456
    %v461 = vsel %vm452, %v447, %v457
    %v462 = vpack.c.bf16 %v460, %v458
    %v463 = vpack.c.bf16 %v461, %v459
    %v464 = vld [vmem:[#allocation9] sm:$0xf]
    %v465 = vld [vmem:[#allocation9 + $0x4] sm:$0xf]
    %v466 = vld [vmem:[#allocation9 + $0x8] sm:$0xf]
    %v467 = vld [vmem:[#allocation9 + $0xc] sm:$0xf]
    %v468 = vld [vmem:[#allocation9 + $0x10] sm:$0xf]
    %v469 = vld [vmem:[#allocation9 + $0x14] sm:$0xf]
    %v470 = vld [vmem:[#allocation9 + $0x18] sm:$0xf]
    %v471 = vld [vmem:[#allocation9 + $0x1c] sm:$0xf]
    %v472 = vld [vmem:[#allocation9 + $0x20] sm:$0xf]
    %v473 = vld [vmem:[#allocation9 + $0x24] sm:$0xf]
    %v474 = vld [vmem:[#allocation9 + $0x28] sm:$0xf]
    %v475 = vld [vmem:[#allocation9 + $0x2c] sm:$0xf]
    %v476 = vld [vmem:[#allocation9 + $0x30] sm:$0xf]
    %v477 = vld [vmem:[#allocation9 + $0x34] sm:$0xf]
    %v478 = vld [vmem:[#allocation9 + $0x38] sm:$0xf]
    %v479 = vld [vmem:[#allocation9 + $0x3c] sm:$0xf]
    %v480 = vld [vmem:[#allocation9 + $0x40] sm:$0xf]
    %v481 = vld [vmem:[#allocation9 + $0x44] sm:$0xf]
    %v482 = vld [vmem:[#allocation9 + $0x48] sm:$0xf]
    %v483 = vld [vmem:[#allocation9 + $0x4c] sm:$0xf]
    %v484 = vld [vmem:[#allocation9 + $0x50] sm:$0xf]
    %v485 = vld [vmem:[#allocation9 + $0x54] sm:$0xf]
    %v486 = vld [vmem:[#allocation9 + $0x58] sm:$0xf]
    %v487 = vld [vmem:[#allocation9 + $0x5c] sm:$0xf]
    %v488 = vld [vmem:[#allocation9 + $0x60] sm:$0xf]
    %v489 = vld [vmem:[#allocation9 + $0x64] sm:$0xf]
    %v490 = vld [vmem:[#allocation9 + $0x68] sm:$0xf]
    %v491 = vld [vmem:[#allocation9 + $0x6c] sm:$0xf]
    %v492 = vld [vmem:[#allocation9 + $0x70] sm:$0xf]
    %v493 = vld [vmem:[#allocation9 + $0x74] sm:$0xf]
    %v494 = vld [vmem:[#allocation9 + $0x78] sm:$0xf]
    %v495 = vld [vmem:[#allocation9 + $0x7c] sm:$0xf]
    %v496 = vld [vmem:[%s6] sm:$0x1]
    %v498 = vlaneseq
    %v499 = vshrl.u32 %v498, 7
    %v500 = vsub.s32 0, %v499
    %v501 = vrot.slane %v496, %v500
    %v535 = vunpack.c.l.b16 %v464
    %v536 = vunpack.c.l.b16 %v465
    %v537 = vunpack.c.l.b16 %v466
    %v538 = vunpack.c.l.b16 %v467
    %v539 = vunpack.c.l.b16 %v468
    %v540 = vunpack.c.l.b16 %v469
    %v541 = vunpack.c.l.b16 %v470
    %v542 = vunpack.c.l.b16 %v471
    %v543 = vunpack.c.l.b16 %v472
    %v544 = vunpack.c.l.b16 %v473
    %v545 = vunpack.c.l.b16 %v474
    %v546 = vunpack.c.l.b16 %v475
    %v547 = vunpack.c.l.b16 %v476
    %v548 = vunpack.c.l.b16 %v477
    %v549 = vunpack.c.l.b16 %v478
    %v550 = vunpack.c.l.b16 %v479
    %v551 = vunpack.c.l.b16 %v480
    %v552 = vunpack.c.l.b16 %v481
    %v553 = vunpack.c.l.b16 %v482
    %v554 = vunpack.c.l.b16 %v483
    %v555 = vunpack.c.l.b16 %v484
    %v556 = vunpack.c.l.b16 %v485
    %v557 = vunpack.c.l.b16 %v486
    %v558 = vunpack.c.l.b16 %v487
    %v559 = vunpack.c.l.b16 %v488
    %v560 = vunpack.c.l.b16 %v489
    %v561 = vunpack.c.l.b16 %v490
    %v562 = vunpack.c.l.b16 %v491
    %v563 = vunpack.c.l.b16 %v492
    %v564 = vunpack.c.l.b16 %v493
    %v565 = vunpack.c.l.b16 %v494
    %v566 = vunpack.c.l.b16 %v495
    %v567 = vpack.c.b16 %v536, %v535
    %v568 = vpack.c.b16 %v538, %v537
    %v569 = vpack.c.b16 %v540, %v539
    %v570 = vpack.c.b16 %v542, %v541
    %v571 = vpack.c.b16 %v544, %v543
    %v572 = vpack.c.b16 %v546, %v545
    %v573 = vpack.c.b16 %v548, %v547
    %v574 = vpack.c.b16 %v550, %v549
    %v575 = vpack.c.b16 %v552, %v551
    %v576 = vpack.c.b16 %v554, %v553
    %v577 = vpack.c.b16 %v556, %v555
    %v578 = vpack.c.b16 %v558, %v557
    %v579 = vpack.c.b16 %v560, %v559
    %v580 = vpack.c.b16 %v562, %v561
    %v581 = vpack.c.b16 %v564, %v563
    %v582 = vpack.c.b16 %v566, %v565
    %599 = vmatprep.subr.bf16.mxu0 0
    %600 = vmatpush1.bf16.msra.mxu0 %v574
    %601 = vmatprep.subr.bf16.mxu0 0
    %602 = vmatpush1.bf16.msra.mxu0 %v573
    %603 = vmatprep.subr.bf16.mxu0 0
    %604 = vmatpush1.bf16.msra.mxu0 %v572
    %605 = vmatprep.subr.bf16.mxu0 0
    %606 = vmatpush1.bf16.msra.mxu0 %v571
    %607 = vmatprep.subr.bf16.mxu0 0
    %608 = vmatpush1.bf16.msra.mxu0 %v570
    %609 = vmatprep.subr.bf16.mxu0 0
    %610 = vmatpush1.bf16.msra.mxu0 %v569
    %611 = vmatprep.subr.bf16.mxu0 0
    %612 = vmatpush1.bf16.msra.mxu0 %v568
    %613 = vmatprep.subr.bf16.mxu0 0
    %614 = vmatpush1.bf16.msra.mxu0 %v567
    %615 = vmatprep.subr.bf16.mxu0 0
    %616 = vmatpush2.bf16.msra.mxu0 %v582
    %617 = vmatprep.subr.bf16.mxu0 0
    %618 = vmatpush2.bf16.msra.mxu0 %v581
    %619 = vmatprep.subr.bf16.mxu0 0
    %620 = vmatpush2.bf16.msra.mxu0 %v580
    %621 = vmatprep.subr.bf16.mxu0 0
    %622 = vmatpush2.bf16.msra.mxu0 %v579
    %623 = vmatprep.subr.bf16.mxu0 0
    %624 = vmatpush2.bf16.msra.mxu0 %v578
    %625 = vmatprep.subr.bf16.mxu0 0
    %626 = vmatpush2.bf16.msra.mxu0 %v577
    %627 = vmatprep.subr.bf16.mxu0 0
    %628 = vmatpush2.bf16.msra.mxu0 %v576
    %629 = vmatprep.subr.bf16.mxu0 0
    %630 = vmatpush2.bf16.msra.mxu0 %v575
    %631 = vmatprep.mubr.bf16.mxu0 %v463
    %632 = vmatmul.mubr.bf16.gmra.mxu0 %v462
    %v633 = vpop.f32.mrf.mxu0
    %v634 = vadd.f32 %v501, %v633
    %v635 = vpop.f32.mrf.mxu0
    %v636 = vpop.f32.mrf.mxu0
    %v637 = vadd.f32 %v501, %v636
    %v638 = vpop.f32.mrf.mxu0
    %639 = vdwg.mxu0
    %v640 = vlaneseq
    %v641 = vand.u32 %v640, 127
    %642 = vmax.xlane.f32.xlu0 %v634
    %v643 = vpop.xlane.xlu0 %642
    %644 = vmax.xlane.f32.xlu0 %v637
    %v645 = vpop.xlane.xlu0 %644
    %vm646 = vcmp.eq.f32.partialorder %v634, %v643
    %vm647 = vcmp.eq.f32.partialorder %v637, %v645
    %v648 = vsel %vm646, %v641, 128
    %v649 = vsel %vm647, %v641, 128
    %v650 = vand.u32 %v648, 65535
    %v651 = vshra.s32 %v648, 16
    %v652 = vcvt.s32.f32 %v650
    %v653 = vcvt.s32.f32 %v651
    %654 = vmin.xlane.f32.xlu0 %v653
    %v655 = vpop.xlane.xlu0 %654
    %vm656 = vcmp.eq.f32.partialorder %v653, %v655
    %v657 = vsel %vm656, %v652, inf
    %658 = vmin.xlane.f32.xlu0 %v657
    %v659 = vpop.xlane.xlu0 %658
    %v660 = vcvt.f32.s32 %v659
    %v661 = vcvt.f32.s32 %v655
    %v662 = vshll.u32 %v661, 16
    %v663 = vadd.s32 %v662, %v660
    %v664 = vand.u32 %v649, 65535
    %v665 = vshra.s32 %v649, 16
    %v666 = vcvt.s32.f32 %v664
    %v667 = vcvt.s32.f32 %v665
    %668 = vmin.xlane.f32.xlu0 %v667
    %v669 = vpop.xlane.xlu0 %668
    %vm670 = vcmp.eq.f32.partialorder %v667, %v669
    %v671 = vsel %vm670, %v666, inf
    %672 = vmin.xlane.f32.xlu0 %v671
    %v673 = vpop.xlane.xlu0 %672
    %v674 = vcvt.f32.s32 %v673
    %v675 = vcvt.f32.s32 %v669
    %v676 = vshll.u32 %v675, 16
    %v677 = vadd.s32 %v676, %v674
    %678 = vxpose.xlu0.b32.start [1/16] %v663, 128
    %679 = vxpose.xlu0.b32.cont [2/16] %v677, 128
    %680 = vxpose.xlu0.b32.cont [3/16] 0, 128
    %681 = vxpose.xlu0.b32.cont [4/16] 0, 128
    %682 = vxpose.xlu0.b32.cont [5/16] 0, 128
    %683 = vxpose.xlu0.b32.cont [6/16] 0, 128
    %684 = vxpose.xlu0.b32.cont [7/16] 0, 128
    %685 = vxpose.xlu0.b32.cont [8/16] 0, 128
    %686 = vxpose.xlu0.b32.cont [9/16] 0, 128
    %687 = vxpose.xlu0.b32.cont [10/16] 0, 128
    %688 = vxpose.xlu0.b32.cont [11/16] 0, 128
    %689 = vxpose.xlu0.b32.cont [12/16] 0, 128
    %690 = vxpose.xlu0.b32.cont [13/16] 0, 128
    %691 = vxpose.xlu0.b32.cont [14/16] 0, 128
    %692 = vxpose.xlu0.b32.cont [15/16] 0, 128
    %693 = vxpose.xlu0.b32.end [16/16] 0, 128
    %v694 = vpop.trf.xlu0
    %v695 = vpop.trf.xlu0
    %v696 = vpop.trf.xlu0
    %v697 = vpop.trf.xlu0
    %v698 = vpop.trf.xlu0
    %v699 = vpop.trf.xlu0
    %v700 = vpop.trf.xlu0
    %v701 = vpop.trf.xlu0
    %v702 = vpop.trf.xlu0
    %v703 = vpop.trf.xlu0
    %v704 = vpop.trf.xlu0
    %v705 = vpop.trf.xlu0
    %v706 = vpop.trf.xlu0
    %v707 = vpop.trf.xlu0
    %v708 = vpop.trf.xlu0
    %v709 = vpop.trf.xlu0
    %vm710 = vcmask 122880
    %711 = vst.msk [vmem:[#allocation12] sm:$0x1] %vm710, %v694
    // Predicated region
    $region54: #{tpu_custom_call.1} parent=1 // pred_check
      _
    $region55: #{tpu_custom_call.1} parent=1 // pred_check_branch
      %713 = sbr.rel (0) target = $region57
    $region56: #{tpu_custom_call.1} parent=1 // pred_region
      %s715 = ssub.s32 16, 16
      %716 = vsyncadd [#allocation4], %s715
      %s718 = sshll.u32 [#allocation12], 4
      %s719 = int_to_ptr.vmem [resolvable:$true] %s718
      %721 = dma.vmem_to_hbm [thread:$0]  %s719, 16, %s8, [#allocation4]
    $region57: #{tpu_custom_call.1} parent=1 // pred_fallthru
      _
    // Predicated region
    $region58: #{tpu_custom_call.1} parent=1 // pred_check
      _
    $region59: #{tpu_custom_call.1} parent=1 // pred_check_branch
      %723 = sbr.rel (0) target = $region61
    $region60: #{tpu_custom_call.1} parent=1 // pred_region
      %724 = dma.done [#allocation4], 16
    $region61: #{tpu_custom_call.1} parent=1 // pred_fallthru
      _
    %725 = vsyncpa [#allocation3], 1
    %726 = vsyncpa [#allocation7], 1
    %727 = vsyncpa [#allocation10], 1
    %728 = vsyncpa [#allocation4], 1
    %729 = vsyncpa [#allocation5], 1

// kernel: tpu_custom_call.1
$region0: #{tpu_custom_call.1}
  #allocation0 [shape = 'u32[]', space=smem, size = 0x4, offset = 0x4, fixed_abs, tag = 'smem constant byte address 0x4 - core index']
  #allocation1 [shape = 'u32[144,128]{1,0:T(1,128)}', space=vmem, size = 0x12000, scoped, tag = 'internal scratch']
  %s0 = inlined_call_operand.hbm [shape: f32[16,32], index: 0, kind: input, shape index: {}]
  %s1 = inlined_call_operand.hbm [shape: bf16[32,256], index: 1, kind: input, shape index: {}]
  %s2 = inlined_call_operand.vmem [shape: f32[1,256], index: 2, kind: input, shape index: {}]
  %s3 = inlined_call_operand.hbm [shape: bf16[256,256], index: 3, kind: input, shape index: {}]
  %s4 = inlined_call_operand.vmem [shape: f32[1,256], index: 4, kind: input, shape index: {}]
  %s5 = inlined_call_operand.hbm [shape: bf16[256,128], index: 5, kind: input, shape index: {}]
  %s6 = inlined_call_operand.vmem [shape: f32[1,128], index: 6, kind: input, shape index: {}]
  %s7 = inlined_call_operand.vmem [shape: f32[2], index: 7, kind: input, shape index: {}]
  %s8 = inlined_call_operand.hbm [shape: s32[1,16], index: 8, kind: output, shape index: {}]
  %s9 = sld [smem:[#allocation0]]
  $region62: #{tpu_custom_call.1} parent=0
    _
  %s11 = ssub.s32 1, %s9
  %s12 = scalar_select 0, %s11, %s9
  $region1: #{tpu_custom_call.1} parent=0
    #allocation2 [shape = 'u8[8192]{0}', space=vmem, size = 0x2000, scoped, tag = 'input window, operand 0, single buffered']
    #allocation3 [shape = 's32[1]{0}', space=sflag, size = 0x4, scoped, tag = 'scoped memory for tpu_custom_call.1']
    #allocation4 [shape = 's32[1]{0}', space=sflag, size = 0x4, scoped, tag = 'scoped memory for tpu_custom_call.1']
    #allocation5 [shape = 's32[1]{0}', space=sflag, size = 0x4, scoped, tag = 'scoped memory for tpu_custom_call.1']
    #allocation6 [shape = 'u8[16384]{0}', space=vmem, size = 0x4000, scoped, tag = 'input window, operand 1, single buffered']
    #allocation7 [shape = 's32[1]{0}', space=sflag, size = 0x4, scoped, tag = 'scoped memory for tpu_custom_call.1']
    #allocation8 [shape = 'u8[131072]{0}', space=vmem, size = 0x20000, scoped, tag = 'input window, operand 3, single buffered']
    #allocation9 [shape = 'u8[65536]{0}', space=vmem, size = 0x10000, scoped, tag = 'input window, operand 5, single buffered']
    #allocation10 [shape = 's32[1]{0}', space=sflag, size = 0x4, scoped, tag = 'scoped memory for tpu_custom_call.1']
    #allocation11 [shape = 'u8[512]{0}', space=smem, size = 0x200, scoped, tag = 'input window, operand 7, single buffered']
    #allocation12 [shape = 'u8[512]{0}', space=vmem, size = 0x400, scoped, tag = 'output window, operand 0, single buffered']
    %13 = vsyncpa [#allocation3], 0
    %14 = vsyncpa [#allocation7], 0
    %15 = vsyncpa [#allocation10], 0
    %16 = vsyncpa [#allocation5], 0
    %17 = vsyncpa [#allocation4], 0
    // Predicated region
    $region2: #{tpu_custom_call.1} parent=1 // pred_check
      _
    $region3: #{tpu_custom_call.1} parent=1 // pred_check_branch
      %19 = sbr.rel (0) target = $region5
    $region4: #{tpu_custom_call.1} parent=1 // pred_region
      %s21 = ssub.s32 256, 256
      %22 = vsyncadd [#allocation3], %s21
      %s23 = sshll.u32 [#allocation2], 4
      %s24 = int_to_ptr.vmem [resolvable:$true] %s23
      %29 = dma.hbm_to_vmem [thread:$0]  %s0, 256, %s24, [#allocation3], 128, 128, 8
    $region5: #{tpu_custom_call.1} parent=1 // pred_fallthru
      _
    // Predicated region
    $region6: #{tpu_custom_call.1} parent=1 // pred_check
      _
    $region7: #{tpu_custom_call.1} parent=1 // pred_check_branch
      %31 = sbr.rel (0) target = $region9
    $region8: #{tpu_custom_call.1} parent=1 // pred_region
      %s33 = ssub.s32 512, 512
      %34 = vsyncadd [#allocation7], %s33
      %s35 = sshll.u32 [#allocation6], 4
      %s36 = int_to_ptr.vmem [resolvable:$true] %s35
      %41 = dma.hbm_to_vmem [thread:$0]  %s1, 512, %s36, [#allocation7], 128, 128, 8
    $region9: #{tpu_custom_call.1} parent=1 // pred_fallthru
      _
    // Predicated region
    $region10: #{tpu_custom_call.1} parent=1 // pred_check
      _
    $region11: #{tpu_custom_call.1} parent=1 // pred_check_branch
      %43 = sbr.rel (0) target = $region13
    $region12: #{tpu_custom_call.1} parent=1 // pred_region
      _
    $region13: #{tpu_custom_call.1} parent=1 // pred_fallthru
      _
    // Predicated region
    $region14: #{tpu_custom_call.1} parent=1 // pred_check
      _
    $region15: #{tpu_custom_call.1} parent=1 // pred_check_branch
      %45 = sbr.rel (0) target = $region17
    $region16: #{tpu_custom_call.1} parent=1 // pred_region
      %s47 = ssub.s32 4096, 4096
      %48 = vsyncadd [#allocation7], %s47
      %s49 = sshll.u32 [#allocation8], 4
      %s50 = int_to_ptr.vmem [resolvable:$true] %s49
      %55 = dma.hbm_to_vmem [thread:$0]  %s3, 4096, %s50, [#allocation7], 128, 128, 8
    $region17: #{tpu_custom_call.1} parent=1 // pred_fallthru
      _
    // Predicated region
    $region18: #{tpu_custom_call.1} parent=1 // pred_check
      _
    $region19: #{tpu_custom_call.1} parent=1 // pred_check_branch
      %57 = sbr.rel (0) target = $region21
    $region20: #{tpu_custom_call.1} parent=1 // pred_region
      _
    $region21: #{tpu_custom_call.1} parent=1 // pred_fallthru
      _
    // Predicated region
    $region22: #{tpu_custom_call.1} parent=1 // pred_check
      _
    $region23: #{tpu_custom_call.1} parent=1 // pred_check_branch
      %59 = sbr.rel (0) target = $region25
    $region24: #{tpu_custom_call.1} parent=1 // pred_region
      %s61 = ssub.s32 2048, 2048
      %62 = vsyncadd [#allocation10], %s61
      %s63 = sshll.u32 [#allocation9], 4
      %s64 = int_to_ptr.vmem [resolvable:$true] %s63
      %69 = dma.hbm_to_vmem [thread:$0]  %s5, 2048, %s64, [#allocation10], 64, 64, 4
    $region25: #{tpu_custom_call.1} parent=1 // pred_fallthru
      _
    // Predicated region
    $region26: #{tpu_custom_call.1} parent=1 // pred_check
      _
    $region27: #{tpu_custom_call.1} parent=1 // pred_check_branch
      %71 = sbr.rel (0) target = $region29
    $region28: #{tpu_custom_call.1} parent=1 // pred_region
      _
    $region29: #{tpu_custom_call.1} parent=1 // pred_fallthru
      _
    // Predicated region
    $region30: #{tpu_custom_call.1} parent=1 // pred_check
      _
    $region31: #{tpu_custom_call.1} parent=1 // pred_check_branch
      %73 = sbr.rel (0) target = $region33
    $region32: #{tpu_custom_call.1} parent=1 // pred_region
      %s75 = ssub.s32 16, 16
      %76 = vsyncadd [#allocation5], %s75
      %s78 = sshll.u32 %s7, 4
      %s79 = int_to_ptr.vmem [resolvable:$true] %s78
      %81 = dma.vmem_to_smem %s79, 16, [#allocation11], [#allocation5]
    $region33: #{tpu_custom_call.1} parent=1 // pred_fallthru
      _
    // Predicated region
    $region34: #{tpu_custom_call.1} parent=1 // pred_check
      _
    $region35: #{tpu_custom_call.1} parent=1 // pred_check_branch
      %83 = sbr.rel (0) target = $region37
    $region36: #{tpu_custom_call.1} parent=1 // pred_region
      %84 = dma.done [#allocation3], 256
    $region37: #{tpu_custom_call.1} parent=1 // pred_fallthru
      _
    // Predicated region
    $region38: #{tpu_custom_call.1} parent=1 // pred_check
      _
    $region39: #{tpu_custom_call.1} parent=1 // pred_check_branch
      %86 = sbr.rel (0) target = $region41
    $region40: #{tpu_custom_call.1} parent=1 // pred_region
      %87 = dma.done [#allocation7], 512
    $region41: #{tpu_custom_call.1} parent=1 // pred_fallthru
      _
    // Predicated region
    $region42: #{tpu_custom_call.1} parent=1 // pred_check
      _
    $region43: #{tpu_custom_call.1} parent=1 // pred_check_branch
      %89 = sbr.rel (0) target = $region45
    $region44: #{tpu_custom_call.1} parent=1 // pred_region
      %90 = dma.done [#allocation7], 4096
    $region45: #{tpu_custom_call.1} parent=1 // pred_fallthru
      _
    // Predicated region
    $region46: #{tpu_custom_call.1} parent=1 // pred_check
      _
    $region47: #{tpu_custom_call.1} parent=1 // pred_check_branch
      %92 = sbr.rel (0) target = $region49
    $region48: #{tpu_custom_call.1} parent=1 // pred_region
      %93 = dma.done [#allocation10], 2048
    $region49: #{tpu_custom_call.1} parent=1 // pred_fallthru
      _
    // Predicated region
    $region50: #{tpu_custom_call.1} parent=1 // pred_check
      _
    $region51: #{tpu_custom_call.1} parent=1 // pred_check_branch
      %95 = sbr.rel (0) target = $region53
    $region52: #{tpu_custom_call.1} parent=1 // pred_region
      %96 = dma.done [#allocation5], 16
    $region53: #{tpu_custom_call.1} parent=1 // pred_fallthru
      _
    %97 = sfence
    %v99 = vld [vmem:[#allocation2] sm:$0xff]
    %v100 = vld [vmem:[#allocation2 + $0x8] sm:$0xff]
    %v101 = vpack.c.bf16 %v100, %v99
    %s102 = sld [smem:[#allocation11]]
    %s103 = sld [smem:[#allocation11 + $0x1]]
    %v104 = vld [vmem:[#allocation6] sm:$0xff]
    %v105 = vld [vmem:[#allocation6 + $0x8] sm:$0xff]
    %v106 = vld [vmem:[#allocation6 + $0x10] sm:$0xff]
    %v107 = vld [vmem:[#allocation6 + $0x18] sm:$0xff]
    %v108 = vld [vmem:[%s2] sm:$0x3]
    %v110 = vlaneseq
    %v111 = vshrl.u32 %v110, 7
    %v112 = vsub.s32 0, %v111
    %v113 = vrot.slane %v108, %v112
    %v114 = vlaneseq
    %v115 = vshrl.u32 %v114, 7
    %v116 = vsub.s32 1, %v115
    %v117 = vrot.slane %v108, %v116
    %v124 = vunpack.c.l.b16 %v104
    %v125 = vunpack.c.h.b16 %v104
    %v126 = vunpack.c.l.b16 %v105
    %v127 = vunpack.c.h.b16 %v105
    %v128 = vunpack.c.l.b16 %v106
    %v129 = vunpack.c.h.b16 %v106
    %v130 = vunpack.c.l.b16 %v107
    %v131 = vunpack.c.h.b16 %v107
    %v132 = vpack.c.b16 %v126, %v124
    %v133 = vpack.c.b16 %v127, %v125
    %v134 = vpack.c.b16 %v130, %v128
    %v135 = vpack.c.b16 %v131, %v129
    %vm140 = vcmask 261120
    %v142 = vsel %vm140, %v101, 0
    %144 = vmatprep.subr.bf16.mxu0 0
    %145 = vmatpush1.bf16.msra.mxu0 0
    %146 = vmatprep.subr.bf16.mxu0 0
    %147 = vmatpush1.bf16.msra.mxu0 0
    %148 = vmatprep.subr.bf16.mxu0 0
    %149 = vmatpush1.bf16.msra.mxu0 0
    %150 = vmatprep.subr.bf16.mxu0 0
    %151 = vmatpush1.bf16.msra.mxu0 0
    %152 = vmatprep.subr.bf16.mxu0 0
    %153 = vmatpush1.bf16.msra.mxu0 0
    %154 = vmatprep.subr.bf16.mxu0 0
    %155 = vmatpush1.bf16.msra.mxu0 0
    %156 = vmatprep.subr.bf16.mxu0 %v135
    %157 = vmatpush1.bf16.msra.mxu0 %v134
    %158 = vmatprep.subr.bf16.mxu0 %v133
    %159 = vmatpush1.bf16.msra.mxu0 %v132
    %160 = vmatprep.subr.bf16.mxu0 0
    %161 = vmatpush2.bf16.msra.mxu0 0
    %162 = vmatprep.subr.bf16.mxu0 0
    %163 = vmatpush2.bf16.msra.mxu0 0
    %164 = vmatprep.subr.bf16.mxu0 0
    %165 = vmatpush2.bf16.msra.mxu0 0
    %166 = vmatprep.subr.bf16.mxu0 0
    %167 = vmatpush2.bf16.msra.mxu0 0
    %168 = vmatprep.subr.bf16.mxu0 0
    %169 = vmatpush2.bf16.msra.mxu0 0
    %170 = vmatprep.subr.bf16.mxu0 0
    %171 = vmatpush2.bf16.msra.mxu0 0
    %172 = vmatprep.subr.bf16.mxu0 0
    %173 = vmatpush2.bf16.msra.mxu0 0
    %174 = vmatprep.subr.bf16.mxu0 0
    %175 = vmatpush2.bf16.msra.mxu0 0
    %176 = vmatprep.mubr.bf16.mxu0 0
    %177 = vmatmul.mubr.bf16.gmra.mxu0 %v142
    %v178 = vpop.f32.mrf.mxu0
    %v179 = vadd.f32 %v113, %v178
    %v180 = vpop.f32.mrf.mxu0
    %v181 = vadd.f32 %v117, %v180
    %v182 = vpop.f32.mrf.mxu0
    %v183 = vadd.f32 %v113, %v182
    %v184 = vpop.f32.mrf.mxu0
    %v185 = vadd.f32 %v117, %v184
    %186 = vdwg.mxu0
    %vm187 = vcmp.gt.f32.partialorder %v179, 0.0
    %vm188 = vcmp.gt.f32.partialorder %v181, 0.0
    %vm189 = vcmp.gt.f32.partialorder %v183, 0.0
    %vm190 = vcmp.gt.f32.partialorder %v185, 0.0
    %v191 = vstv %s102
    %v192 = vmul.f32 %v191, %v179
    %v193 = vmul.f32 %v191, %v181
    %v194 = vmul.f32 %v191, %v183
    %v195 = vmul.f32 %v191, %v185
    %v196 = vsel %vm187, %v179, %v192
    %v197 = vsel %vm188, %v181, %v193
    %v198 = vsel %vm189, %v183, %v194
    %v199 = vsel %vm190, %v185, %v195
    %v200 = vpack.c.bf16 %v198, %v196
    %v201 = vpack.c.bf16 %v199, %v197
    %v202 = vld [vmem:[#allocation8] sm:$0xff]
    %v203 = vld [vmem:[#allocation8 + $0x8] sm:$0xff]
    %v204 = vld [vmem:[#allocation8 + $0x10] sm:$0xff]
    %v205 = vld [vmem:[#allocation8 + $0x18] sm:$0xff]
    %v206 = vld [vmem:[#allocation8 + $0x20] sm:$0xff]
    %v207 = vld [vmem:[#allocation8 + $0x28] sm:$0xff]
    %v208 = vld [vmem:[#allocation8 + $0x30] sm:$0xff]
    %v209 = vld [vmem:[#allocation8 + $0x38] sm:$0xff]
    %v210 = vld [vmem:[#allocation8 + $0x40] sm:$0xff]
    %v211 = vld [vmem:[#allocation8 + $0x48] sm:$0xff]
    %v212 = vld [vmem:[#allocation8 + $0x50] sm:$0xff]
    %v213 = vld [vmem:[#allocation8 + $0x58] sm:$0xff]
    %v214 = vld [vmem:[#allocation8 + $0x60] sm:$0xff]
    %v215 = vld [vmem:[#allocation8 + $0x68] sm:$0xff]
    %v216 = vld [vmem:[#allocation8 + $0x70] sm:$0xff]
    %v217 = vld [vmem:[#allocation8 + $0x78] sm:$0xff]
    %v218 = vld [vmem:[#allocation8 + $0x80] sm:$0xff]
    %v219 = vld [vmem:[#allocation8 + $0x88] sm:$0xff]
    %v220 = vld [vmem:[#allocation8 + $0x90] sm:$0xff]
    %v221 = vld [vmem:[#allocation8 + $0x98] sm:$0xff]
    %v222 = vld [vmem:[#allocation8 + $0xa0] sm:$0xff]
    %v223 = vld [vmem:[#allocation8 + $0xa8] sm:$0xff]
    %v224 = vld [vmem:[#allocation8 + $0xb0] sm:$0xff]
    %v225 = vld [vmem:[#allocation8 + $0xb8] sm:$0xff]
    %v226 = vld [vmem:[#allocation8 + $0xc0] sm:$0xff]
    %v227 = vld [vmem:[#allocation8 + $0xc8] sm:$0xff]
    %v228 = vld [vmem:[#allocation8 + $0xd0] sm:$0xff]
    %v229 = vld [vmem:[#allocation8 + $0xd8] sm:$0xff]
    %v230 = vld [vmem:[#allocation8 + $0xe0] sm:$0xff]
    %v231 = vld [vmem:[#allocation8 + $0xe8] sm:$0xff]
    %v232 = vld [vmem:[#allocation8 + $0xf0] sm:$0xff]
    %v233 = vld [vmem:[#allocation8 + $0xf8] sm:$0xff]
    %v234 = vld [vmem:[%s4] sm:$0x3]
    %v236 = vlaneseq
    %v237 = vshrl.u32 %v236, 7
    %v238 = vsub.s32 0, %v237
    %v239 = vrot.slane %v234, %v238
    %v240 = vlaneseq
    %v241 = vshrl.u32 %v240, 7
    %v242 = vsub.s32 1, %v241
    %v243 = vrot.slane %v234, %v242
    %v278 = vunpack.c.l.b16 %v202
    %v279 = vunpack.c.h.b16 %v202
    %v280 = vunpack.c.l.b16 %v203
    %v281 = vunpack.c.h.b16 %v203
    %v282 = vunpack.c.l.b16 %v204
    %v283 = vunpack.c.h.b16 %v204
    %v284 = vunpack.c.l.b16 %v205
    %v285 = vunpack.c.h.b16 %v205
    %v286 = vunpack.c.l.b16 %v206
    %v287 = vunpack.c.h.b16 %v206
    %v288 = vunpack.c.l.b16 %v207
    %v289 = vunpack.c.h.b16 %v207
    %v290 = vunpack.c.l.b16 %v208
    %v291 = vunpack.c.h.b16 %v208
    %v292 = vunpack.c.l.b16 %v209
    %v293 = vunpack.c.h.b16 %v209
    %v294 = vunpack.c.l.b16 %v210
    %v295 = vunpack.c.h.b16 %v210
    %v296 = vunpack.c.l.b16 %v211
    %v297 = vunpack.c.h.b16 %v211
    %v298 = vunpack.c.l.b16 %v212
    %v299 = vunpack.c.h.b16 %v212
    %v300 = vunpack.c.l.b16 %v213
    %v301 = vunpack.c.h.b16 %v213
    %v302 = vunpack.c.l.b16 %v214
    %v303 = vunpack.c.h.b16 %v214
    %v304 = vunpack.c.l.b16 %v215
    %v305 = vunpack.c.h.b16 %v215
    %v306 = vunpack.c.l.b16 %v216
    %v307 = vunpack.c.h.b16 %v216
    %v308 = vunpack.c.l.b16 %v217
    %v309 = vunpack.c.h.b16 %v217
    %v310 = vunpack.c.l.b16 %v218
    %v311 = vunpack.c.h.b16 %v218
    %v312 = vunpack.c.l.b16 %v219
    %v313 = vunpack.c.h.b16 %v219
    %v314 = vunpack.c.l.b16 %v220
    %v315 = vunpack.c.h.b16 %v220
    %v316 = vunpack.c.l.b16 %v221
    %v317 = vunpack.c.h.b16 %v221
    %v318 = vunpack.c.l.b16 %v222
    %v319 = vunpack.c.h.b16 %v222
    %v320 = vunpack.c.l.b16 %v223
    %v321 = vunpack.c.h.b16 %v223
    %v322 = vunpack.c.l.b16 %v224
    %v323 = vunpack.c.h.b16 %v224
    %v324 = vunpack.c.l.b16 %v225
    %v325 = vunpack.c.h.b16 %v225
    %v326 = vunpack.c.l.b16 %v226
    %v327 = vunpack.c.h.b16 %v226
    %v328 = vunpack.c.l.b16 %v227
    %v329 = vunpack.c.h.b16 %v227
    %v330 = vunpack.c.l.b16 %v228
    %v331 = vunpack.c.h.b16 %v228
    %v332 = vunpack.c.l.b16 %v229
    %v333 = vunpack.c.h.b16 %v229
    %v334 = vunpack.c.l.b16 %v230
    %v335 = vunpack.c.h.b16 %v230
    %v336 = vunpack.c.l.b16 %v231
    %v337 = vunpack.c.h.b16 %v231
    %v338 = vunpack.c.l.b16 %v232
    %v339 = vunpack.c.h.b16 %v232
    %v340 = vunpack.c.l.b16 %v233
    %v341 = vunpack.c.h.b16 %v233
    %v342 = vpack.c.b16 %v280, %v278
    %v343 = vpack.c.b16 %v281, %v279
    %v344 = vpack.c.b16 %v284, %v282
    %v345 = vpack.c.b16 %v285, %v283
    %v346 = vpack.c.b16 %v288, %v286
    %v347 = vpack.c.b16 %v289, %v287
    %v348 = vpack.c.b16 %v292, %v290
    %v349 = vpack.c.b16 %v293, %v291
    %v350 = vpack.c.b16 %v296, %v294
    %v351 = vpack.c.b16 %v297, %v295
    %v352 = vpack.c.b16 %v300, %v298
    %v353 = vpack.c.b16 %v301, %v299
    %v354 = vpack.c.b16 %v304, %v302
    %v355 = vpack.c.b16 %v305, %v303
    %v356 = vpack.c.b16 %v308, %v306
    %v357 = vpack.c.b16 %v309, %v307
    %v358 = vpack.c.b16 %v312, %v310
    %v359 = vpack.c.b16 %v313, %v311
    %v360 = vpack.c.b16 %v316, %v314
    %v361 = vpack.c.b16 %v317, %v315
    %v362 = vpack.c.b16 %v320, %v318
    %v363 = vpack.c.b16 %v321, %v319
    %v364 = vpack.c.b16 %v324, %v322
    %v365 = vpack.c.b16 %v325, %v323
    %v366 = vpack.c.b16 %v328, %v326
    %v367 = vpack.c.b16 %v329, %v327
    %v368 = vpack.c.b16 %v332, %v330
    %v369 = vpack.c.b16 %v333, %v331
    %v370 = vpack.c.b16 %v336, %v334
    %v371 = vpack.c.b16 %v337, %v335
    %v372 = vpack.c.b16 %v340, %v338
    %v373 = vpack.c.b16 %v341, %v339
    %406 = vmatprep.subr.bf16.mxu0 %v357
    %407 = vmatpush1.bf16.msra.mxu0 %v356
    %408 = vmatprep.subr.bf16.mxu0 %v355
    %409 = vmatpush1.bf16.msra.mxu0 %v354
    %410 = vmatprep.subr.bf16.mxu0 %v353
    %411 = vmatpush1.bf16.msra.mxu0 %v352
    %412 = vmatprep.subr.bf16.mxu0 %v351
    %413 = vmatpush1.bf16.msra.mxu0 %v350
    %414 = vmatprep.subr.bf16.mxu0 %v349
    %415 = vmatpush1.bf16.msra.mxu0 %v348
    %416 = vmatprep.subr.bf16.mxu0 %v347
    %417 = vmatpush1.bf16.msra.mxu0 %v346
    %418 = vmatprep.subr.bf16.mxu0 %v345
    %419 = vmatpush1.bf16.msra.mxu0 %v344
    %420 = vmatprep.subr.bf16.mxu0 %v343
    %421 = vmatpush1.bf16.msra.mxu0 %v342
    %422 = vmatprep.subr.bf16.mxu0 %v373
    %423 = vmatpush2.bf16.msra.mxu0 %v372
    %424 = vmatprep.subr.bf16.mxu0 %v371
    %425 = vmatpush2.bf16.msra.mxu0 %v370
    %426 = vmatprep.subr.bf16.mxu0 %v369
    %427 = vmatpush2.bf16.msra.mxu0 %v368
    %428 = vmatprep.subr.bf16.mxu0 %v367
    %429 = vmatpush2.bf16.msra.mxu0 %v366
    %430 = vmatprep.subr.bf16.mxu0 %v365
    %431 = vmatpush2.bf16.msra.mxu0 %v364
    %432 = vmatprep.subr.bf16.mxu0 %v363
    %433 = vmatpush2.bf16.msra.mxu0 %v362
    %434 = vmatprep.subr.bf16.mxu0 %v361
    %435 = vmatpush2.bf16.msra.mxu0 %v360
    %436 = vmatprep.subr.bf16.mxu0 %v359
    %437 = vmatpush2.bf16.msra.mxu0 %v358
    %438 = vmatprep.mubr.bf16.mxu0 %v201
    %439 = vmatmul.mubr.bf16.gmra.mxu0 %v200
    %v440 = vpop.f32.mrf.mxu0
    %v441 = vadd.f32 %v239, %v440
    %v442 = vpop.f32.mrf.mxu0
    %v443 = vadd.f32 %v243, %v442
    %v444 = vpop.f32.mrf.mxu0
    %v445 = vadd.f32 %v239, %v444
    %v446 = vpop.f32.mrf.mxu0
    %v447 = vadd.f32 %v243, %v446
    %448 = vdwg.mxu0
    %vm449 = vcmp.gt.f32.partialorder %v441, 0.0
    %vm450 = vcmp.gt.f32.partialorder %v443, 0.0
    %vm451 = vcmp.gt.f32.partialorder %v445, 0.0
    %vm452 = vcmp.gt.f32.partialorder %v447, 0.0
    %v453 = vstv %s103
    %v454 = vmul.f32 %v453, %v441
    %v455 = vmul.f32 %v453, %v443
    %v456 = vmul.f32 %v453, %v445
    %v457 = vmul.f32 %v453, %v447
    %v458 = vsel %vm449, %v441, %v454
    %v459 = vsel %vm450, %v443, %v455
    %v460 = vsel %vm451, %v445, %v456
    %v461 = vsel %vm452, %v447, %v457
    %v462 = vpack.c.bf16 %v460, %v458
    %v463 = vpack.c.bf16 %v461, %v459
    %v464 = vld [vmem:[#allocation9] sm:$0xf]
    %v465 = vld [vmem:[#allocation9 + $0x4] sm:$0xf]
    %v466 = vld [vmem:[#allocation9 + $0x8] sm:$0xf]
    %v467 = vld [vmem:[#allocation9 + $0xc] sm:$0xf]
    %v468 = vld [vmem:[#allocation9 + $0x10] sm:$0xf]
    %v469 = vld [vmem:[#allocation9 + $0x14] sm:$0xf]
    %v470 = vld [vmem:[#allocation9 + $0x18] sm:$0xf]
    %v471 = vld [vmem:[#allocation9 + $0x1c] sm:$0xf]
    %v472 = vld [vmem:[#allocation9 + $0x20] sm:$0xf]
    %v473 = vld [vmem:[#allocation9 + $0x24] sm:$0xf]
    %v474 = vld [vmem:[#allocation9 + $0x28] sm:$0xf]
    %v475 = vld [vmem:[#allocation9 + $0x2c] sm:$0xf]
    %v476 = vld [vmem:[#allocation9 + $0x30] sm:$0xf]
    %v477 = vld [vmem:[#allocation9 + $0x34] sm:$0xf]
    %v478 = vld [vmem:[#allocation9 + $0x38] sm:$0xf]
    %v479 = vld [vmem:[#allocation9 + $0x3c] sm:$0xf]
    %v480 = vld [vmem:[#allocation9 + $0x40] sm:$0xf]
    %v481 = vld [vmem:[#allocation9 + $0x44] sm:$0xf]
    %v482 = vld [vmem:[#allocation9 + $0x48] sm:$0xf]
    %v483 = vld [vmem:[#allocation9 + $0x4c] sm:$0xf]
    %v484 = vld [vmem:[#allocation9 + $0x50] sm:$0xf]
    %v485 = vld [vmem:[#allocation9 + $0x54] sm:$0xf]
    %v486 = vld [vmem:[#allocation9 + $0x58] sm:$0xf]
    %v487 = vld [vmem:[#allocation9 + $0x5c] sm:$0xf]
    %v488 = vld [vmem:[#allocation9 + $0x60] sm:$0xf]
    %v489 = vld [vmem:[#allocation9 + $0x64] sm:$0xf]
    %v490 = vld [vmem:[#allocation9 + $0x68] sm:$0xf]
    %v491 = vld [vmem:[#allocation9 + $0x6c] sm:$0xf]
    %v492 = vld [vmem:[#allocation9 + $0x70] sm:$0xf]
    %v493 = vld [vmem:[#allocation9 + $0x74] sm:$0xf]
    %v494 = vld [vmem:[#allocation9 + $0x78] sm:$0xf]
    %v495 = vld [vmem:[#allocation9 + $0x7c] sm:$0xf]
    %v496 = vld [vmem:[%s6] sm:$0x1]
    %v498 = vlaneseq
    %v499 = vshrl.u32 %v498, 7
    %v500 = vsub.s32 0, %v499
    %v501 = vrot.slane %v496, %v500
    %v535 = vunpack.c.l.b16 %v464
    %v536 = vunpack.c.l.b16 %v465
    %v537 = vunpack.c.l.b16 %v466
    %v538 = vunpack.c.l.b16 %v467
    %v539 = vunpack.c.l.b16 %v468
    %v540 = vunpack.c.l.b16 %v469
    %v541 = vunpack.c.l.b16 %v470
    %v542 = vunpack.c.l.b16 %v471
    %v543 = vunpack.c.l.b16 %v472
    %v544 = vunpack.c.l.b16 %v473
    %v545 = vunpack.c.l.b16 %v474
    %v546 = vunpack.c.l.b16 %v475
    %v547 = vunpack.c.l.b16 %v476
    %v548 = vunpack.c.l.b16 %v477
    %v549 = vunpack.c.l.b16 %v478
    %v550 = vunpack.c.l.b16 %v479
    %v551 = vunpack.c.l.b16 %v480
    %v552 = vunpack.c.l.b16 %v481
    %v553 = vunpack.c.l.b16 %v482
    %v554 = vunpack.c.l.b16 %v483
    %v555 = vunpack.c.l.b16 %v484
    %v556 = vunpack.c.l.b16 %v485
    %v557 = vunpack.c.l.b16 %v486
    %v558 = vunpack.c.l.b16 %v487
    %v559 = vunpack.c.l.b16 %v488
    %v560 = vunpack.c.l.b16 %v489
    %v561 = vunpack.c.l.b16 %v490
    %v562 = vunpack.c.l.b16 %v491
    %v563 = vunpack.c.l.b16 %v492
    %v564 = vunpack.c.l.b16 %v493
    %v565 = vunpack.c.l.b16 %v494
    %v566 = vunpack.c.l.b16 %v495
    %v567 = vpack.c.b16 %v536, %v535
    %v568 = vpack.c.b16 %v538, %v537
    %v569 = vpack.c.b16 %v540, %v539
    %v570 = vpack.c.b16 %v542, %v541
    %v571 = vpack.c.b16 %v544, %v543
    %v572 = vpack.c.b16 %v546, %v545
    %v573 = vpack.c.b16 %v548, %v547
    %v574 = vpack.c.b16 %v550, %v549
    %v575 = vpack.c.b16 %v552, %v551
    %v576 = vpack.c.b16 %v554, %v553
    %v577 = vpack.c.b16 %v556, %v555
    %v578 = vpack.c.b16 %v558, %v557
    %v579 = vpack.c.b16 %v560, %v559
    %v580 = vpack.c.b16 %v562, %v561
    %v581 = vpack.c.b16 %v564, %v563
    %v582 = vpack.c.b16 %v566, %v565
    %599 = vmatprep.subr.bf16.mxu0 0
    %600 = vmatpush1.bf16.msra.mxu0 %v574
    %601 = vmatprep.subr.bf16.mxu0 0
    %602 = vmatpush1.bf16.msra.mxu0 %v573
    %603 = vmatprep.subr.bf16.mxu0 0
    %604 = vmatpush1.bf16.msra.mxu0 %v572
    %605 = vmatprep.subr.bf16.mxu0 0
    %606 = vmatpush1.bf16.msra.mxu0 %v571
    %607 = vmatprep.subr.bf16.mxu0 0
    %608 = vmatpush1.bf16.msra.mxu0 %v570
    %609 = vmatprep.subr.bf16.mxu0 0
    %610 = vmatpush1.bf16.msra.mxu0 %v569
    %611 = vmatprep.subr.bf16.mxu0 0
    %612 = vmatpush1.bf16.msra.mxu0 %v568
    %613 = vmatprep.subr.bf16.mxu0 0
    %614 = vmatpush1.bf16.msra.mxu0 %v567
    %615 = vmatprep.subr.bf16.mxu0 0
    %616 = vmatpush2.bf16.msra.mxu0 %v582
    %617 = vmatprep.subr.bf16.mxu0 0
    %618 = vmatpush2.bf16.msra.mxu0 %v581
    %619 = vmatprep.subr.bf16.mxu0 0
    %620 = vmatpush2.bf16.msra.mxu0 %v580
    %621 = vmatprep.subr.bf16.mxu0 0
    %622 = vmatpush2.bf16.msra.mxu0 %v579
    %623 = vmatprep.subr.bf16.mxu0 0
    %624 = vmatpush2.bf16.msra.mxu0 %v578
    %625 = vmatprep.subr.bf16.mxu0 0
    %626 = vmatpush2.bf16.msra.mxu0 %v577
    %627 = vmatprep.subr.bf16.mxu0 0
    %628 = vmatpush2.bf16.msra.mxu0 %v576
    %629 = vmatprep.subr.bf16.mxu0 0
    %630 = vmatpush2.bf16.msra.mxu0 %v575
    %631 = vmatprep.mubr.bf16.mxu0 %v463
    %632 = vmatmul.mubr.bf16.gmra.mxu0 %v462
    %v633 = vpop.f32.mrf.mxu0
    %v634 = vadd.f32 %v501, %v633
    %v635 = vpop.f32.mrf.mxu0
    %v636 = vpop.f32.mrf.mxu0
    %v637 = vadd.f32 %v501, %v636
    %v638 = vpop.f32.mrf.mxu0
    %639 = vdwg.mxu0
    %v640 = vlaneseq
    %v641 = vand.u32 %v640, 127
    %642 = vmax.xlane.f32.xlu0 %v634
    %v643 = vpop.xlane.xlu0 %642
    %644 = vmax.xlane.f32.xlu0 %v637
    %v645 = vpop.xlane.xlu0 %644
    %vm646 = vcmp.eq.f32.partialorder %v634, %v643
    %vm647 = vcmp.eq.f32.partialorder %v637, %v645
    %v648 = vsel %vm646, %v641, 128
    %v649 = vsel %vm647, %v641, 128
    %v650 = vand.u32 %v648, 65535
    %v651 = vshra.s32 %v648, 16
    %v652 = vcvt.s32.f32 %v650
    %v653 = vcvt.s32.f32 %v651
    %654 = vmin.xlane.f32.xlu0 %v653
    %v655 = vpop.xlane.xlu0 %654
    %vm656 = vcmp.eq.f32.partialorder %v653, %v655
    %v657 = vsel %vm656, %v652, inf
    %658 = vmin.xlane.f32.xlu0 %v657
    %v659 = vpop.xlane.xlu0 %658
    %v660 = vcvt.f32.s32 %v659
    %v661 = vcvt.f32.s32 %v655
    %v662 = vshll.u32 %v661, 16
    %v663 = vadd.s32 %v662, %v660
    %v664 = vand.u32 %v649, 65535
    %v665 = vshra.s32 %v649, 16
    %v666 = vcvt.s32.f32 %v664
    %v667 = vcvt.s32.f32 %v665
    %668 = vmin.xlane.f32.xlu0 %v667
    %v669 = vpop.xlane.xlu0 %668
    %vm670 = vcmp.eq.f32.partialorder %v667, %v669
    %v671 = vsel %vm670, %v666, inf
    %672 = vmin.xlane.f32.xlu0 %v671
    %v673 = vpop.xlane.xlu0 %672
    %v674 = vcvt.f32.s32 %v673
    %v675 = vcvt.f32.s32 %v669
    %v676 = vshll.u32 %v675, 16
    %v677 = vadd.s32 %v676, %v674
    %678 = vxpose.xlu0.b32.start [1/16] %v663, 128
    %679 = vxpose.xlu0.b32.cont [2/16] %v677, 128
    %680 = vxpose.xlu0.b32.cont [3/16] 0, 128
    %681 = vxpose.xlu0.b32.cont [4/16] 0, 128
    %682 = vxpose.xlu0.b32.cont [5/16] 0, 128
    %683 = vxpose.xlu0.b32.cont [6/16] 0, 128
    %684 = vxpose.xlu0.b32.cont [7/16] 0, 128
    %685 = vxpose.xlu0.b32.cont [8/16] 0, 128
    %686 = vxpose.xlu0.b32.cont [9/16] 0, 128
    %687 = vxpose.xlu0.b32.cont [10/16] 0, 128
    %688 = vxpose.xlu0.b32.cont [11/16] 0, 128
    %689 = vxpose.xlu0.b32.cont [12/16] 0, 128
    %690 = vxpose.xlu0.b32.cont [13/16] 0, 128
    %691 = vxpose.xlu0.b32.cont [14/16] 0, 128
    %692 = vxpose.xlu0.b32.cont [15/16] 0, 128
    %693 = vxpose.xlu0.b32.end [16/16] 0, 128
    %v694 = vpop.trf.xlu0
    %v695 = vpop.trf.xlu0
    %v696 = vpop.trf.xlu0
    %v697 = vpop.trf.xlu0
    %v698 = vpop.trf.xlu0
    %v699 = vpop.trf.xlu0
    %v700 = vpop.trf.xlu0
    %v701 = vpop.trf.xlu0
    %v702 = vpop.trf.xlu0
    %v703 = vpop.trf.xlu0
    %v704 = vpop.trf.xlu0
    %v705 = vpop.trf.xlu0
    %v706 = vpop.trf.xlu0
    %v707 = vpop.trf.xlu0
    %v708 = vpop.trf.xlu0
    %v709 = vpop.trf.xlu0
    %vm710 = vcmask 122880
    %711 = vst.msk [vmem:[#allocation12] sm:$0x1] %vm710, %v694
    // Predicated region
    $region54: #{tpu_custom_call.1} parent=1 // pred_check
      _
    $region55: #{tpu_custom_call.1} parent=1 // pred_check_branch
      %713 = sbr.rel (0) target = $region57
    $region56: #{tpu_custom_call.1} parent=1 // pred_region
      %s715 = ssub.s32 16, 16
      %716 = vsyncadd [#allocation4], %s715
      %s718 = sshll.u32 [#allocation12], 4
      %s719 = int_to_ptr.vmem [resolvable:$true] %s718
      %721 = dma.vmem_to_hbm [thread:$0]  %s719, 16, %s8, [#allocation4]
    $region57: #{tpu_custom_call.1} parent=1 // pred_fallthru
      _
    // Predicated region
    $region58: #{tpu_custom_call.1} parent=1 // pred_check
      _
    $region59: #{tpu_custom_call.1} parent=1 // pred_check_branch
      %723 = sbr.rel (0) target = $region61
    $region60: #{tpu_custom_call.1} parent=1 // pred_region
      %724 = dma.done [#allocation4], 16
    $region61: #{tpu_custom_call.1} parent=1 // pred_fallthru
      _
    %725 = vsyncpa [#allocation3], 1
    %726 = vsyncpa [#allocation7], 1
    %727 = vsyncpa [#allocation10], 1
    %728 = vsyncpa [#allocation4], 1
    %729 = vsyncpa [#allocation5], 1

</llo_original>
